<compile_context>
chip_gen: v7x
topology: tpu7x:2x2x1
jax: 0.10.0
libtpu: 0.0.40
codegen_flags: <defaults>
</compile_context>

<pallas_src>
import jax
import jax.numpy as jnp
from jax.experimental import pallas as pl
from jax.experimental.pallas import tpu as pltpu


OUT_PAD = 128  # pad the 6-wide output to a full 128-lane slab (dense stores)


def mlp_kernel(x_ref, w1_ref, b1_ref, w234_ref, o_ref, acc_h1, acc_out):
    # grid = (batch_tile, n over H1, k over IN); k is the layer-1 reduction axis.
    n = pl.program_id(1)
    k = pl.program_id(2)
    n_last = pl.num_programs(1) - 1
    k_last = pl.num_programs(2) - 1

    @pl.when(jnp.logical_and(n == 0, k == 0))
    def _():
        acc_out[...] = jnp.zeros_like(acc_out)

    @pl.when(k == 0)
    def _():
        acc_h1[...] = jnp.zeros_like(acc_h1)

    # layer-1 partial product: (tb, tk) @ (tk, tn); bf16 in, f32 accumulate.
    acc_h1[...] += jnp.dot(
        x_ref[...], w1_ref[...], preferred_element_type=jnp.float32
    )

    @pl.when(k == k_last)
    def _():
        # Fused epilogue for this H1 tile: bias + ReLU in f32 (VPU), then
        # immediately contract with the matching W234 slice so the full
        # (tb, H1) activation is never materialized.
        h = jnp.maximum(acc_h1[...] + b1_ref[...], 0.0)
        acc_out[...] += jnp.dot(
            h.astype(jnp.bfloat16), w234_ref[...],
            preferred_element_type=jnp.float32,
        )

    @pl.when(jnp.logical_and(n == n_last, k == k_last))
    def _():
        o_ref[...] = jax.nn.sigmoid(acc_out[...]).astype(o_ref.dtype)


def mlp_forward(x, w1, b1, w2, w3, w4, *, tb=128, tn=512, tk=512):
    """x: (B, IN) f32; w*: (in, out) f32; b1: (1, H1) f32  ->  (B, OUT) f32."""
    B, IN = x.shape
    H1 = w1.shape[1]
    OUT = w4.shape[1]

    tb = min(tb, B)
    tn = min(tn, H1)
    tk = min(tk, IN)
    assert B % tb == 0 and H1 % tn == 0 and IN % tk == 0

    # Algebraic collapse of layers 2-4 (pure linear chain), done once in f32,
    # then zero-padded to a lane-dense 128-wide tail.
    w234 = (w2 @ w3) @ w4                                     # (H1, OUT) f32
    w234_p = jnp.zeros((H1, OUT_PAD), jnp.float32).at[:, :OUT].set(w234)

    # bf16 MXU operands; bias / accumulators / epilogue stay f32.
    x_bf = x.astype(jnp.bfloat16)
    w1_bf = w1.astype(jnp.bfloat16)
    w234_bf = w234_p.astype(jnp.bfloat16)

    out_p = pl.pallas_call(
        mlp_kernel,
        out_shape=jax.ShapeDtypeStruct((B, OUT_PAD), jnp.float32),
        grid_spec=pltpu.PrefetchScalarGridSpec(
            num_scalar_prefetch=0,
            grid=(B // tb, H1 // tn, IN // tk),
            in_specs=[
                pl.BlockSpec((tb, tk), lambda i, n, k: (i, k)),        # x tile
                pl.BlockSpec((tk, tn), lambda i, n, k: (k, n)),        # W1 (streamed)
                pl.BlockSpec((1, tn), lambda i, n, k: (0, n)),         # b1 slice
                pl.BlockSpec((tn, OUT_PAD), lambda i, n, k: (n, 0)),   # W234 slice
            ],
            out_specs=pl.BlockSpec((tb, OUT_PAD), lambda i, n, k: (i, 0)),
            scratch_shapes=[
                pltpu.VMEM((tb, tn), jnp.float32),        # layer-1 accumulator
                pltpu.VMEM((tb, OUT_PAD), jnp.float32),   # output accumulator
            ],
        ),
        compiler_params=pltpu.CompilerParams(
            # batch axis parallel (v7x dual TensorCores); H1 / K axes carry
            # the resident accumulators -> must be arbitrary.
            dimension_semantics=("parallel", "arbitrary", "arbitrary"),
            vmem_limit_bytes=48 * 1024 * 1024,  # headroom-safe on v7x (64 MiB)
        ),
    )(x_bf, w1_bf, b1, w234_bf)

    return out_p[:, :OUT]


def init_linear(key, in_f, out_f, bias):
    """PyTorch nn.Linear default init: U(-1/sqrt(in), 1/sqrt(in))."""
    kw, kb = jax.random.split(key)
    bound = 1.0 / jnp.sqrt(jnp.float32(in_f))
    # PyTorch stores weight as (out, in); transpose to (in, out) for x @ W.
    w = jax.random.uniform(kw, (out_f, in_f), jnp.float32, -bound, bound).T
    b = None
    if bias:
        b = jax.random.uniform(kb, (out_f,), jnp.float32, -bound, bound)
        b = b.reshape(1, out_f)
    return w, b


if __name__ == "__main__":
    # Scaled-down dims (structure matches the module: 4 Linear layers,
    # bias only on layer1, ReLU after layer1, sigmoid at the end).
    B, IN, H1, H2, H3, OUT = 256, 2048, 1024, 512, 100, 6

    key = jax.random.PRNGKey(0)
    kx, k1, k2, k3, k4 = jax.random.split(key, 5)

    x = jax.random.normal(kx, (B, IN), jnp.float32)
    w1, b1 = init_linear(k1, IN, H1, bias=True)
    w2, _ = init_linear(k2, H1, H2, bias=False)
    w3, _ = init_linear(k3, H2, H3, bias=False)
    w4, _ = init_linear(k4, H3, OUT, bias=False)

    out = mlp_forward(x, w1, b1, w2, w3, w4, tb=128, tn=512, tk=512)
    out = jax.block_until_ready(out)
    assert out.shape == (B, OUT)

    # Reference 1 (tight): same bf16 operands / collapsed W234 as the kernel.
    w234 = (w2 @ w3) @ w4
    h_ref = jnp.dot(x.astype(jnp.bfloat16), w1.astype(jnp.bfloat16),
                    preferred_element_type=jnp.float32) + b1
    h_ref = jnp.maximum(h_ref, 0.0)
    ref_bf16 = jax.nn.sigmoid(
        jnp.dot(h_ref.astype(jnp.bfloat16), w234.astype(jnp.bfloat16),
                preferred_element_type=jnp.float32))
    assert jnp.allclose(out, ref_bf16, atol=2e-3, rtol=2e-3), \
        "mismatch vs bf16-matched reference"

    # Reference 2 (loose, semantics): original layer-by-layer f32 forward.
    ref_f32 = jnp.maximum(x @ w1 + b1, 0.0)
    ref_f32 = jax.nn.sigmoid(((ref_f32 @ w2) @ w3) @ w4)
    assert jnp.allclose(out, ref_f32, atol=5e-2), \
        "mismatch vs f32 layerwise reference"

    print("KERNEL_OK")
</pallas_src>

<mosaic_0001>
module attributes {stable_mosaic.version = 11 : i64} {
  func.func @mlp_kernel(%arg0: i32, %arg1: i32, %arg2: i32, %arg3: memref<128x512xbf16, #tpu.memory_space<vmem>>, %arg4: memref<512x512xbf16, #tpu.memory_space<vmem>>, %arg5: memref<1x512xf32, #tpu.memory_space<vmem>>, %arg6: memref<512x128xbf16, #tpu.memory_space<vmem>>, %arg7: memref<128x128xf32, #tpu.memory_space<vmem>>, %arg8: memref<128x512xf32, #tpu.memory_space<vmem>>, %arg9: memref<128x128xf32, #tpu.memory_space<vmem>>) attributes {dimension_semantics = [#tpu.dimension_semantics<parallel>, #tpu.dimension_semantics<arbitrary>, #tpu.dimension_semantics<arbitrary>], iteration_bounds = array<i64: 2, 2, 4>, scalar_prefetch = 0 : i64, scratch_operands = 2 : i64, tpu.core_type = #tpu.core_type<tc>, window_params = [{transform_indices = @transform_0, window_bounds = array<i64: 128, 512>}, {transform_indices = @transform_1, window_bounds = array<i64: 512, 512>}, {transform_indices = @transform_2, window_bounds = array<i64: 1, 512>}, {transform_indices = @transform_3, window_bounds = array<i64: 512, 128>}, {transform_indices = @transform_4, window_bounds = array<i64: 128, 128>}]} {
    %c0_i32 = arith.constant 0 : i32
    %0 = arith.cmpi eq, %arg1, %c0_i32 : i32
    %c0_i32_0 = arith.constant 0 : i32
    %1 = arith.cmpi eq, %arg2, %c0_i32_0 : i32
    %2 = arith.andi %0, %1 : i1
    %3 = arith.extui %2 : i1 to i32
    %c0_i32_1 = arith.constant 0 : i32
    %4 = arith.cmpi ne, %3, %c0_i32_1 : i32
    scf.if %4 {
      %cst_14 = arith.constant 0.000000e+00 : f32
      %22 = vector.broadcast %cst_14 : f32 to vector<128x128xf32>
      %c0_15 = arith.constant 0 : index
      %c0_16 = arith.constant 0 : index
      %23 = vector.load %arg9[%c0_15, %c0_16] : memref<128x128xf32, #tpu.memory_space<vmem>>, vector<128x128xf32>
      tpu.vector_store %arg9[%c0_15, %c0_16], %22 {strides = array<i32>} : memref<128x128xf32, #tpu.memory_space<vmem>>, vector<128x128xf32>,
    } else {
    }
    %c0_i32_2 = arith.constant 0 : i32
    %5 = arith.cmpi eq, %arg2, %c0_i32_2 : i32
    %6 = arith.extui %5 : i1 to i32
    %c0_i32_3 = arith.constant 0 : i32
    %7 = arith.cmpi ne, %6, %c0_i32_3 : i32
    scf.if %7 {
      %cst_14 = arith.constant 0.000000e+00 : f32
      %22 = vector.broadcast %cst_14 : f32 to vector<128x512xf32>
      %c0_15 = arith.constant 0 : index
      %c0_16 = arith.constant 0 : index
      %23 = vector.load %arg8[%c0_15, %c0_16] : memref<128x512xf32, #tpu.memory_space<vmem>>, vector<128x512xf32>
      tpu.vector_store %arg8[%c0_15, %c0_16], %22 {strides = array<i32>} : memref<128x512xf32, #tpu.memory_space<vmem>>, vector<128x512xf32>,
    } else {
    }
    %c0 = arith.constant 0 : index
    %c0_4 = arith.constant 0 : index
    %8 = vector.load %arg8[%c0, %c0_4] : memref<128x512xf32, #tpu.memory_space<vmem>>, vector<128x512xf32>
    %c0_5 = arith.constant 0 : index
    %c0_6 = arith.constant 0 : index
    %9 = vector.load %arg3[%c0_5, %c0_6] : memref<128x512xbf16, #tpu.memory_space<vmem>>, vector<128x512xbf16>
    %c0_7 = arith.constant 0 : index
    %c0_8 = arith.constant 0 : index
    %10 = vector.load %arg4[%c0_7, %c0_8] : memref<512x512xbf16, #tpu.memory_space<vmem>>, vector<512x512xbf16>
    %cst = arith.constant dense<0.000000e+00> : vector<128x512xf32>
    %11 = tpu.matmul %9, %10, %cst {dimension_numbers = #tpu.dot_dimension_numbers<[1], [0], [0], [1], [0, 0, 1, 1], [], []>} : vector<128x512xbf16>, vector<512x512xbf16>, vector<128x512xf32> -> vector<128x512xf32>
    %12 = arith.addf %8, %11 : vector<128x512xf32>
    %c0_9 = arith.constant 0 : index
    %c0_10 = arith.constant 0 : index
    %13 = vector.load %arg8[%c0_9, %c0_10] : memref<128x512xf32, #tpu.memory_space<vmem>>, vector<128x512xf32>
    tpu.vector_store %arg8[%c0_9, %c0_10], %12 {strides = array<i32>} : memref<128x512xf32, #tpu.memory_space<vmem>>, vector<128x512xf32>,
    %c3_i32 = arith.constant 3 : i32
    %14 = arith.cmpi eq, %arg2, %c3_i32 : i32
    %15 = arith.extui %14 : i1 to i32
    %c0_i32_11 = arith.constant 0 : i32
    %16 = arith.cmpi ne, %15, %c0_i32_11 : i32
    scf.if %16 {
      %c0_14 = arith.constant 0 : index
      %c0_15 = arith.constant 0 : index
      %22 = vector.load %arg8[%c0_14, %c0_15] : memref<128x512xf32, #tpu.memory_space<vmem>>, vector<128x512xf32>
      %c0_16 = arith.constant 0 : index
      %c0_17 = arith.constant 0 : index
      %23 = vector.load %arg5[%c0_16, %c0_17] : memref<1x512xf32, #tpu.memory_space<vmem>>, vector<1x512xf32>
      %24 = vector.broadcast %23 : vector<1x512xf32> to vector<128x512xf32>
      %25 = arith.addf %22, %24 : vector<128x512xf32>
      %cst_18 = arith.constant 0.000000e+00 : f32
      %26 = vector.broadcast %cst_18 : f32 to vector<128x512xf32>
      %27 = arith.maximumf %25, %26 : vector<128x512xf32>
      %c0_19 = arith.constant 0 : index
      %c0_20 = arith.constant 0 : index
      %28 = vector.load %arg9[%c0_19, %c0_20] : memref<128x128xf32, #tpu.memory_space<vmem>>, vector<128x128xf32>
      %29 = arith.truncf %27 : vector<128x512xf32> to vector<128x512xbf16>
      %c0_21 = arith.constant 0 : index
      %c0_22 = arith.constant 0 : index
      %30 = vector.load %arg6[%c0_21, %c0_22] : memref<512x128xbf16, #tpu.memory_space<vmem>>, vector<512x128xbf16>
      %cst_23 = arith.constant dense<0.000000e+00> : vector<128x128xf32>
      %31 = tpu.matmul %29, %30, %cst_23 {dimension_numbers = #tpu.dot_dimension_numbers<[1], [0], [0], [1], [0, 0, 1, 1], [], []>} : vector<128x512xbf16>, vector<512x128xbf16>, vector<128x128xf32> -> vector<128x128xf32>
      %32 = arith.addf %28, %31 : vector<128x128xf32>
      %c0_24 = arith.constant 0 : index
      %c0_25 = arith.constant 0 : index
      %33 = vector.load %arg9[%c0_24, %c0_25] : memref<128x128xf32, #tpu.memory_space<vmem>>, vector<128x128xf32>
      tpu.vector_store %arg9[%c0_24, %c0_25], %32 {strides = array<i32>} : memref<128x128xf32, #tpu.memory_space<vmem>>, vector<128x128xf32>,
    } else {
    }
    %c1_i32 = arith.constant 1 : i32
    %17 = arith.cmpi eq, %arg1, %c1_i32 : i32
    %c3_i32_12 = arith.constant 3 : i32
    %18 = arith.cmpi eq, %arg2, %c3_i32_12 : i32
    %19 = arith.andi %17, %18 : i1
    %20 = arith.extui %19 : i1 to i32
    %c0_i32_13 = arith.constant 0 : i32
    %21 = arith.cmpi ne, %20, %c0_i32_13 : i32
    scf.if %21 {
      %c0_14 = arith.constant 0 : index
      %c0_15 = arith.constant 0 : index
      %22 = vector.load %arg9[%c0_14, %c0_15] : memref<128x128xf32, #tpu.memory_space<vmem>>, vector<128x128xf32>
      %23 = arith.negf %22 : vector<128x128xf32>
      %24 = math.exp %23 : vector<128x128xf32>
      %cst_16 = arith.constant 1.000000e+00 : f32
      %25 = vector.broadcast %cst_16 : f32 to vector<128x128xf32>
      %26 = arith.addf %25, %24 : vector<128x128xf32>
      %27 = arith.divf %25, %26 : vector<128x128xf32>
      %c0_17 = arith.constant 0 : index
      %c0_18 = arith.constant 0 : index
      %28 = vector.load %arg7[%c0_17, %c0_18] : memref<128x128xf32, #tpu.memory_space<vmem>>, vector<128x128xf32>
      tpu.vector_store %arg7[%c0_17, %c0_18], %27 {strides = array<i32>} : memref<128x128xf32, #tpu.memory_space<vmem>>, vector<128x128xf32>,
    } else {
    }
    return
  }
  func.func @transform_0(%arg0: i32, %arg1: i32, %arg2: i32) -> (i32, i32) {
    %c0_i32 = arith.constant 0 : i32
    return %arg0, %arg2 : i32, i32
  }
  func.func @transform_1(%arg0: i32, %arg1: i32, %arg2: i32) -> (i32, i32) {
    %c0_i32 = arith.constant 0 : i32
    return %arg2, %arg1 : i32, i32
  }
  func.func @transform_2(%arg0: i32, %arg1: i32, %arg2: i32) -> (i32, i32) {
    %c0_i32 = arith.constant 0 : i32
    %c0_i32_0 = arith.constant 0 : i32
    return %c0_i32, %arg1 : i32, i32
  }
  func.func @transform_3(%arg0: i32, %arg1: i32, %arg2: i32) -> (i32, i32) {
    %c0_i32 = arith.constant 0 : i32
    %c0_i32_0 = arith.constant 0 : i32
    return %arg1, %c0_i32 : i32, i32
  }
  func.func @transform_4(%arg0: i32, %arg1: i32, %arg2: i32) -> (i32, i32) {
    %c0_i32 = arith.constant 0 : i32
    %c0_i32_0 = arith.constant 0 : i32
    return %arg0, %c0_i32 : i32, i32
  }
}

</mosaic_0001>

<llo_original>
// kernel: tpu_custom_call.1
$region0: #{tpu_custom_call.1}
  #allocation0 [shape = 'u32[]', space=smem, size = 0x4, offset = 0x4, fixed_abs, tag = 'smem constant byte address 0x4 - core index']
  #allocation1 [shape = 'u32[144,128]{1,0:T(1,128)}', space=vmem, size = 0x12000, scoped, tag = 'internal scratch']
  #allocation2 [shape = 'f32[128,512]{1,0:T(8,128)}', space=vmem, size = 0x40000, scoped, tag = 'scratch operand']
  #allocation3 [shape = 'f32[128,128]{1,0:T(8,128)}', space=vmem, size = 0x10000, scoped, tag = 'scratch operand']
  %s0 = inlined_call_operand.hbm [shape: bf16[256,2048], index: 0, kind: input, shape index: {}]
  %s1 = inlined_call_operand.hbm [shape: bf16[2048,1024], index: 1, kind: input, shape index: {}]
  %s2 = inlined_call_operand.hbm [shape: f32[1,1024], index: 2, kind: input, shape index: {}]
  %s3 = inlined_call_operand.hbm [shape: bf16[1024,128], index: 3, kind: input, shape index: {}]
  %s4 = inlined_call_operand.hbm [shape: f32[256,128], index: 4, kind: output, shape index: {}]
  %s5 = sld [smem:[#allocation0]]
  $region81: #{tpu_custom_call.1} parent=0
    _
  %s7 = ssub.s32 1, %s5
  %s8 = scalar_select 0, %s7, %s5
  $region1: #{tpu_custom_call.1} parent=0
    #allocation4 [shape = 'u8[262144]{0}', space=vmem, size = 0x40000, scoped, tag = 'input window, operand 0']
    #allocation5 [shape = 's32[2]{0}', space=sflag, size = 0x8, scoped, tag = 'scoped memory for tpu_custom_call.1']
    #allocation6 [shape = 's32[2]{0}', space=sflag, size = 0x8, scoped, tag = 'scoped memory for tpu_custom_call.1']
    #allocation7 [shape = 'u8[1048576]{0}', space=vmem, size = 0x100000, scoped, tag = 'input window, operand 1']
    #allocation8 [shape = 's32[2]{0}', space=sflag, size = 0x8, scoped, tag = 'scoped memory for tpu_custom_call.1']
    #allocation9 [shape = 'u8[4096]{0}', space=vmem, size = 0x1000, scoped, tag = 'input window, operand 2']
    #allocation10 [shape = 'u8[262144]{0}', space=vmem, size = 0x40000, scoped, tag = 'input window, operand 3']
    #allocation11 [shape = 's32[2]{0}', space=sflag, size = 0x8, scoped, tag = 'scoped memory for tpu_custom_call.1']
    #allocation12 [shape = 'u8[131072]{0}', space=vmem, size = 0x20000, scoped, tag = 'output window, operand 0']
    %9 = vsyncpa [#allocation5], 0
    %s10 = scalar_lea.sflag [#allocation5], 1
    %11 = vsyncpa %s10, 0
    %12 = vsyncpa [#allocation8], 0
    %s13 = scalar_lea.sflag [#allocation8], 1
    %14 = vsyncpa %s13, 0
    %15 = vsyncpa [#allocation11], 0
    %s16 = scalar_lea.sflag [#allocation11], 1
    %17 = vsyncpa %s16, 0
    %18 = vsyncpa [#allocation6], 0
    %s19 = scalar_lea.sflag [#allocation6], 1
    %20 = vsyncpa %s19, 0
    loop: start=0, step=1, limit=18
    $region2: #{tpu_custom_call.1} parent=1 // loop_pre_header
      _
    $region3: #{tpu_custom_call.1} parent=1 // loop_header
      %s22 = sphi 0, %s26
      %p23 = scmp.ge.s32.totalorder %s22, 18
      %s29 = sphi 0, %s48
      %s30 = sphi 0, %s44
      %s31 = sphi 0, %s40
      %s32 = sphi 0, %s29
      %s33 = sphi 0, %s30
      %s34 = sphi 0, %s31
      %s35 = sphi 0, %s32
      %s36 = sphi 0, %s33
      %s37 = sphi 0, %s34
      %s53 = sphi 0, %s55
      %s56 = sphi 0, %s53
      %s57 = sphi 0, %s56
      %s73 = sphi 0, %s57
      %s81 = sphi 0, %s83
      %s84 = sphi 0, %s81
      %s85 = sphi 0, %s84
      %s101 = sphi 0, %s85
      %s107 = sphi 0, %s109
      %s110 = sphi 0, %s107
      %s111 = sphi 0, %s110
      %s127 = sphi 0, %s111
      %s133 = sphi 0, %s135
      %s136 = sphi 0, %s133
      %s137 = sphi 0, %s136
      %s153 = sphi 0, %s137
      %s159 = sphi 0, %s161
      %s162 = sphi 0, %s159
      %s163 = sphi 0, %s162
      %s179 = sphi 0, %s163
    $region4: #{tpu_custom_call.1} parent=1 // loop_header_branch
      %25 = sbr.rel (%p23) target = $region8
    $region5: #{tpu_custom_call.1} parent=1 // loop_body
      %s27 = ssub.s32 %s22, 1
      %s28 = ssub.s32 %s22, 2
      %s38 = sadd.s32 1, %s31
      %p39 = scmp.ge.s32.totalorder %s38, 4
      %s40 = scalar_select %p39, 0, %s38
      %s41 = sadd.s32 1, %s30
      %s42 = scalar_select %p39, %s41, %s30
      %p43 = scmp.ge.s32.totalorder %s42, 2
      %s44 = scalar_select %p43, 0, %s42
      %s45 = sadd.s32 1, %s29
      %s46 = scalar_select %p43, %s45, %s29
      %p47 = scmp.ge.s32.totalorder %s46, 2
      %s48 = scalar_select %p47, 0, %s46
      %s49 = ssub.s32 %s29, %s48
      %s50 = ssub.s32 %s31, %s40
      %s51 = sor.u32 %s49, %s50
      %p52 = scmp.eq.s32.totalorder %s51, 0
      %s54 = sadd.s32 %s53, 1
      %s55 = scalar_select %p52, %s53, %s54
      %p58 = pneg %p52
      %p59 = scmp.eq.s32.totalorder %s22, 15
      %p60 = por %p58, %p59
      %p61 = scmp.ne.s32.totalorder %s53, %s56
      %p62 = scmp.eq.s32.totalorder %s22, 0
      %p63 = por %p61, %p62
      %p64 = scmp.ne.s32.totalorder %s53, %s56
      %p65 = scmp.eq.s32.totalorder %s27, 15
      %p66 = por %p64, %p65
      %p67 = scmp.ne.s32.totalorder %s56, %s57
      %p68 = scmp.eq.s32.totalorder %s27, 0
      %p69 = por %p67, %p68
      %p70 = scmp.ne.s32.totalorder %s56, %s57
      %p71 = scmp.eq.s32.totalorder %s28, 15
      %p72 = por %p70, %p71
      %p74 = scmp.ne.s32.totalorder %s57, %s73
      %p75 = scmp.eq.s32.totalorder %s28, 0
      %p76 = por %p74, %p75
      %s77 = ssub.s32 %s31, %s40
      %s78 = ssub.s32 %s30, %s44
      %s79 = sor.u32 %s77, %s78
      %p80 = scmp.eq.s32.totalorder %s79, 0
      %s82 = sadd.s32 %s81, 1
      %s83 = scalar_select %p80, %s81, %s82
      %p86 = pneg %p80
      %p87 = scmp.eq.s32.totalorder %s22, 15
      %p88 = por %p86, %p87
      %p89 = scmp.ne.s32.totalorder %s81, %s84
      %p90 = scmp.eq.s32.totalorder %s22, 0
      %p91 = por %p89, %p90
      %p92 = scmp.ne.s32.totalorder %s81, %s84
      %p93 = scmp.eq.s32.totalorder %s27, 15
      %p94 = por %p92, %p93
      %p95 = scmp.ne.s32.totalorder %s84, %s85
      %p96 = scmp.eq.s32.totalorder %s27, 0
      %p97 = por %p95, %p96
      %p98 = scmp.ne.s32.totalorder %s84, %s85
      %p99 = scmp.eq.s32.totalorder %s28, 15
      %p100 = por %p98, %p99
      %p102 = scmp.ne.s32.totalorder %s85, %s101
      %p103 = scmp.eq.s32.totalorder %s28, 0
      %p104 = por %p102, %p103
      %s105 = ssub.s32 %s30, %s44
      %p106 = scmp.eq.s32.totalorder %s105, 0
      %s108 = sadd.s32 %s107, 1
      %s109 = scalar_select %p106, %s107, %s108
      %p112 = pneg %p106
      %p113 = scmp.eq.s32.totalorder %s22, 15
      %p114 = por %p112, %p113
      %p115 = scmp.ne.s32.totalorder %s107, %s110
      %p116 = scmp.eq.s32.totalorder %s22, 0
      %p117 = por %p115, %p116
      %p118 = scmp.ne.s32.totalorder %s107, %s110
      %p119 = scmp.eq.s32.totalorder %s27, 15
      %p120 = por %p118, %p119
      %p121 = scmp.ne.s32.totalorder %s110, %s111
      %p122 = scmp.eq.s32.totalorder %s27, 0
      %p123 = por %p121, %p122
      %p124 = scmp.ne.s32.totalorder %s110, %s111
      %p125 = scmp.eq.s32.totalorder %s28, 15
      %p126 = por %p124, %p125
      %p128 = scmp.ne.s32.totalorder %s111, %s127
      %p129 = scmp.eq.s32.totalorder %s28, 0
      %p130 = por %p128, %p129
      %s131 = ssub.s32 %s30, %s44
      %p132 = scmp.eq.s32.totalorder %s131, 0
      %s134 = sadd.s32 %s133, 1
      %s135 = scalar_select %p132, %s133, %s134
      %p138 = pneg %p132
      %p139 = scmp.eq.s32.totalorder %s22, 15
      %p140 = por %p138, %p139
      %p141 = scmp.ne.s32.totalorder %s133, %s136
      %p142 = scmp.eq.s32.totalorder %s22, 0
      %p143 = por %p141, %p142
      %p144 = scmp.ne.s32.totalorder %s133, %s136
      %p145 = scmp.eq.s32.totalorder %s27, 15
      %p146 = por %p144, %p145
      %p147 = scmp.ne.s32.totalorder %s136, %s137
      %p148 = scmp.eq.s32.totalorder %s27, 0
      %p149 = por %p147, %p148
      %p150 = scmp.ne.s32.totalorder %s136, %s137
      %p151 = scmp.eq.s32.totalorder %s28, 15
      %p152 = por %p150, %p151
      %p154 = scmp.ne.s32.totalorder %s137, %s153
      %p155 = scmp.eq.s32.totalorder %s28, 0
      %p156 = por %p154, %p155
      %s157 = ssub.s32 %s29, %s48
      %p158 = scmp.eq.s32.totalorder %s157, 0
      %s160 = sadd.s32 %s159, 1
      %s161 = scalar_select %p158, %s159, %s160
      %p164 = pneg %p158
      %p165 = scmp.eq.s32.totalorder %s22, 15
      %p166 = por %p164, %p165
      %p167 = scmp.ne.s32.totalorder %s159, %s162
      %p168 = scmp.eq.s32.totalorder %s22, 0
      %p169 = por %p167, %p168
      %p170 = scmp.ne.s32.totalorder %s159, %s162
      %p171 = scmp.eq.s32.totalorder %s27, 15
      %p172 = por %p170, %p171
      %p173 = scmp.ne.s32.totalorder %s162, %s163
      %p174 = scmp.eq.s32.totalorder %s27, 0
      %p175 = por %p173, %p174
      %p176 = scmp.ne.s32.totalorder %s162, %s163
      %p177 = scmp.eq.s32.totalorder %s28, 15
      %p178 = por %p176, %p177
      %p180 = scmp.ne.s32.totalorder %s163, %s179
      %p181 = scmp.eq.s32.totalorder %s28, 0
      %p182 = por %p180, %p181
      %p183 = scmp.le.s32.totalorder 1, %s22
      %p184 = scmp.lt.s32.totalorder %s22, 17
      %p185 = pnand %p183, %p184
      %p186 = pneg %p185
      // Predicated region
      $region9: #{tpu_custom_call.1} parent=5 // pred_check
        _
      $region10: #{tpu_custom_call.1} parent=5 // pred_check_branch
        %188 = sbr.rel (%p185) target = $region12
      $region11: #{tpu_custom_call.1} parent=5 // pred_region
        %s189 = ssub.s32 %s22, 1
      $region12: #{tpu_custom_call.1} parent=5 // pred_fallthru
        _
      %p190 = scmp.lt.s32.totalorder %s22, 16
      // Predicated region
      $region13: #{tpu_custom_call.1} parent=5 // pred_check
        %p191 = pneg %p190
      $region14: #{tpu_custom_call.1} parent=5 // pred_check_branch
        %193 = sbr.rel (%p191) target = $region16
      $region15: #{tpu_custom_call.1} parent=5 // pred_region
        // Predicated region
        $region17: #{tpu_custom_call.1} parent=15 // pred_check
          %p194 = pneg %p63
        $region18: #{tpu_custom_call.1} parent=15 // pred_check_branch
          %196 = sbr.rel (%p194) target = $region20
        $region19: #{tpu_custom_call.1} parent=15 // pred_region
          %s197 = sand.u32 %s53, 1
          %s198 = scalar_lea.sflag [#allocation5], %s197
          %s199 = sand.u32 %s53, 1
          %s200 = smul.addr %s199, 256
          %s201 = scalar_lea.vmem [#allocation4], %s200
          %s202 = smul.u32 16, %s29
          %s203 = smul.u32 4, %s31
          %s205 = ssub.s32 4096, 4096
          %206 = vsyncadd %s198, %s205
          %s207 = smul.addr %s202, 16
          %s208 = sadd.s32 %s203, %s207
          %s209 = smul.addr %s208, 64
          %s210 = scalar_lea.hbm %s0, %s209
          %s211 = sshll.u32 %s201, 4
          %s212 = int_to_ptr.vmem [resolvable:$true] %s211
          %217 = dma.hbm_to_vmem [thread:$0]  %s210, 4096, %s212, %s198, 1024, 256, 16
        $region20: #{tpu_custom_call.1} parent=15 // pred_fallthru
          _
        // Predicated region
        $region21: #{tpu_custom_call.1} parent=15 // pred_check
          %p218 = pneg %p91
        $region22: #{tpu_custom_call.1} parent=15 // pred_check_branch
          %220 = sbr.rel (%p218) target = $region24
        $region23: #{tpu_custom_call.1} parent=15 // pred_region
          %s221 = sand.u32 %s22, 1
          %s222 = scalar_lea.sflag [#allocation8], %s221
          %s223 = sand.u32 %s81, 1
          %s224 = smul.addr %s223, 1024
          %s225 = scalar_lea.vmem [#allocation7], %s224
          %s226 = smul.u32 64, %s31
          %s227 = smul.u32 4, %s30
          %s229 = ssub.s32 16384, 16384
          %230 = vsyncadd %s222, %s229
          %s231 = smul.addr %s226, 8
          %s232 = sadd.s32 %s227, %s231
          %s233 = smul.addr %s232, 64
          %s234 = scalar_lea.hbm %s1, %s233
          %s235 = sshll.u32 %s225, 4
          %s236 = int_to_ptr.vmem [resolvable:$true] %s235
          %241 = dma.hbm_to_vmem [thread:$0]  %s234, 16384, %s236, %s222, 512, 256, 16
        $region24: #{tpu_custom_call.1} parent=15 // pred_fallthru
          _
        // Predicated region
        $region25: #{tpu_custom_call.1} parent=15 // pred_check
          %p242 = pneg %p117
        $region26: #{tpu_custom_call.1} parent=15 // pred_check_branch
          %244 = sbr.rel (%p242) target = $region28
        $region27: #{tpu_custom_call.1} parent=15 // pred_region
          %s245 = sand.u32 %s22, 1
          %s246 = scalar_lea.sflag [#allocation8], %s245
          %s247 = sand.u32 %s107, 1
          %s248 = smul.addr %s247, 4
          %s249 = scalar_lea.vmem [#allocation9], %s248
          %s250 = smul.u32 4, %s30
          %s252 = ssub.s32 64, 64
          %253 = vsyncadd %s246, %s252
          %s254 = smul.addr %s250, 16
          %s255 = scalar_lea.hbm %s2, %s254
          %s257 = sshll.u32 %s249, 4
          %s258 = int_to_ptr.vmem [resolvable:$true] %s257
          %260 = dma.hbm_to_vmem [thread:$0]  %s255, 64, %s258, %s246
        $region28: #{tpu_custom_call.1} parent=15 // pred_fallthru
          _
        // Predicated region
        $region29: #{tpu_custom_call.1} parent=15 // pred_check
          %p261 = pneg %p143
        $region30: #{tpu_custom_call.1} parent=15 // pred_check_branch
          %263 = sbr.rel (%p261) target = $region32
        $region31: #{tpu_custom_call.1} parent=15 // pred_region
          %s264 = sand.u32 %s133, 1
          %s265 = scalar_lea.sflag [#allocation11], %s264
          %s266 = sand.u32 %s133, 1
          %s267 = smul.addr %s266, 256
          %s268 = scalar_lea.vmem [#allocation10], %s267
          %s269 = smul.u32 64, %s30
          %s271 = ssub.s32 4096, 4096
          %272 = vsyncadd %s265, %s271
          %s273 = smul.addr %s269, 64
          %s274 = scalar_lea.hbm %s3, %s273
          %s275 = sshll.u32 %s268, 4
          %s276 = int_to_ptr.vmem [resolvable:$true] %s275
          %281 = dma.hbm_to_vmem [thread:$0]  %s274, 4096, %s276, %s265, 64, 64, 4
        $region32: #{tpu_custom_call.1} parent=15 // pred_fallthru
          _
      $region16: #{tpu_custom_call.1} parent=5 // pred_fallthru
        _
      %p282 = scmp.le.s32.totalorder 1, %s22
      %p283 = scmp.lt.s32.totalorder %s22, 17
      %p284 = pnand %p282, %p283
      %p285 = pneg %p284
      // Predicated region
      $region33: #{tpu_custom_call.1} parent=5 // pred_check
        _
      $region34: #{tpu_custom_call.1} parent=5 // pred_check_branch
        %287 = sbr.rel (%p284) target = $region36
      $region35: #{tpu_custom_call.1} parent=5 // pred_region
        %s288 = ssub.s32 %s22, 1
        %s289 = sand.u32 %s56, 1
        %s290 = scalar_lea.sflag [#allocation5], %s289
        %s291 = sand.u32 %s56, 1
        %s292 = smul.addr %s291, 256
        %s293 = scalar_lea.vmem [#allocation4], %s292
        // Predicated region
        $region37: #{tpu_custom_call.1} parent=35 // pred_check
          %p294 = pneg %p69
        $region38: #{tpu_custom_call.1} parent=35 // pred_check_branch
          %296 = sbr.rel (%p294) target = $region40
        $region39: #{tpu_custom_call.1} parent=35 // pred_region
          %297 = dma.done %s290, 4096
        $region40: #{tpu_custom_call.1} parent=35 // pred_fallthru
          _
        %s298 = sand.u32 %s27, 1
        %s299 = scalar_lea.sflag [#allocation8], %s298
        %s300 = sand.u32 %s84, 1
        %s301 = smul.addr %s300, 1024
        %s302 = scalar_lea.vmem [#allocation7], %s301
        // Predicated region
        $region41: #{tpu_custom_call.1} parent=35 // pred_check
          %p303 = pneg %p97
        $region42: #{tpu_custom_call.1} parent=35 // pred_check_branch
          %305 = sbr.rel (%p303) target = $region44
        $region43: #{tpu_custom_call.1} parent=35 // pred_region
          %306 = dma.done %s299, 16384
        $region44: #{tpu_custom_call.1} parent=35 // pred_fallthru
          _
        %s307 = sand.u32 %s27, 1
        %s308 = scalar_lea.sflag [#allocation8], %s307
        %s309 = sand.u32 %s110, 1
        %s310 = smul.addr %s309, 4
        %s311 = scalar_lea.vmem [#allocation9], %s310
        // Predicated region
        $region45: #{tpu_custom_call.1} parent=35 // pred_check
          %p312 = pneg %p123
        $region46: #{tpu_custom_call.1} parent=35 // pred_check_branch
          %314 = sbr.rel (%p312) target = $region48
        $region47: #{tpu_custom_call.1} parent=35 // pred_region
          %315 = dma.done %s308, 64
        $region48: #{tpu_custom_call.1} parent=35 // pred_fallthru
          _
        %s316 = sand.u32 %s136, 1
        %s317 = scalar_lea.sflag [#allocation11], %s316
        %s318 = sand.u32 %s136, 1
        %s319 = smul.addr %s318, 256
        %s320 = scalar_lea.vmem [#allocation10], %s319
        // Predicated region
        $region49: #{tpu_custom_call.1} parent=35 // pred_check
          %p321 = pneg %p149
        $region50: #{tpu_custom_call.1} parent=35 // pred_check_branch
          %323 = sbr.rel (%p321) target = $region52
        $region51: #{tpu_custom_call.1} parent=35 // pred_region
          %324 = dma.done %s317, 4096
        $region52: #{tpu_custom_call.1} parent=35 // pred_fallthru
          _
        %s325 = sand.u32 %s56, 1
        %s326 = scalar_lea.sflag [#allocation5], %s325
        %s327 = sand.u32 %s56, 1
        %s328 = smul.addr %s327, 256
        %s329 = scalar_lea.vmem [#allocation4], %s328
        %p330 = pneg %p69
        %p331 = pneg %p66
        %s332 = sand.u32 %s27, 1
        %s333 = scalar_lea.sflag [#allocation8], %s332
        %s334 = sand.u32 %s84, 1
        %s335 = smul.addr %s334, 1024
        %s336 = scalar_lea.vmem [#allocation7], %s335
        %p337 = pneg %p97
        %p338 = pneg %p94
        %s339 = sand.u32 %s27, 1
        %s340 = scalar_lea.sflag [#allocation8], %s339
        %s341 = sand.u32 %s110, 1
        %s342 = smul.addr %s341, 4
        %s343 = scalar_lea.vmem [#allocation9], %s342
        %p344 = pneg %p123
        %p345 = pneg %p120
        %s346 = sand.u32 %s136, 1
        %s347 = scalar_lea.sflag [#allocation11], %s346
        %s348 = sand.u32 %s136, 1
        %s349 = smul.addr %s348, 256
        %s350 = scalar_lea.vmem [#allocation10], %s349
        %p351 = pneg %p149
        %p352 = pneg %p146
        %p353 = pneg %p175
        %p354 = pneg %p172
        %s355 = sand.u32 %s162, 1
        %s356 = scalar_lea.sflag [#allocation6], %s355
        %s357 = sand.u32 %s162, 1
        %s358 = smul.addr %s357, 128
        %s359 = scalar_lea.vmem [#allocation12], %s358
        %s360 = smul.u32 16, %s32
        %s361 = smul.u32 4, %s34
        %s362 = smul.u32 64, %s34
        %s363 = smul.u32 4, %s33
        %s364 = smul.u32 4, %s33
        %s365 = smul.u32 64, %s33
        %s366 = smul.u32 16, %s32
        %p368 = scmp.eq.s32.totalorder %s33, 0
        %p369 = scmp.eq.s32.totalorder %s34, 0
        %p370 = pnand %p368, %p369
        %p371 = pneg %p370
        // Predicated region
        $region53: #{tpu_custom_call.1} parent=35 // pred_check
          _
        $region54: #{tpu_custom_call.1} parent=35 // pred_check_branch
          %373 = sbr.rel (%p370) target = $region56
        $region55: #{tpu_custom_call.1} parent=35 // pred_region
          %374 = vst [vmem:[#allocation3] sm:$0xff] 0.0
          %375 = vst [vmem:[#allocation3 + $0x8] sm:$0xff] 0.0
          %376 = vst [vmem:[#allocation3 + $0x10] sm:$0xff] 0.0
          %377 = vst [vmem:[#allocation3 + $0x18] sm:$0xff] 0.0
          %378 = vst [vmem:[#allocation3 + $0x20] sm:$0xff] 0.0
          %379 = vst [vmem:[#allocation3 + $0x28] sm:$0xff] 0.0
          %380 = vst [vmem:[#allocation3 + $0x30] sm:$0xff] 0.0
          %381 = vst [vmem:[#allocation3 + $0x38] sm:$0xff] 0.0
          %382 = vst [vmem:[#allocation3 + $0x40] sm:$0xff] 0.0
          %383 = vst [vmem:[#allocation3 + $0x48] sm:$0xff] 0.0
          %384 = vst [vmem:[#allocation3 + $0x50] sm:$0xff] 0.0
          %385 = vst [vmem:[#allocation3 + $0x58] sm:$0xff] 0.0
          %386 = vst [vmem:[#allocation3 + $0x60] sm:$0xff] 0.0
          %387 = vst [vmem:[#allocation3 + $0x68] sm:$0xff] 0.0
          %388 = vst [vmem:[#allocation3 + $0x70] sm:$0xff] 0.0
          %389 = vst [vmem:[#allocation3 + $0x78] sm:$0xff] 0.0
        $region56: #{tpu_custom_call.1} parent=35 // pred_fallthru
          _
        // Predicated region
        $region57: #{tpu_custom_call.1} parent=35 // pred_check
          %p390 = pneg %p369
        $region58: #{tpu_custom_call.1} parent=35 // pred_check_branch
          %392 = sbr.rel (%p390) target = $region60
        $region59: #{tpu_custom_call.1} parent=35 // pred_region
          %393 = vst [vmem:[#allocation2] sm:$0xff] 0.0
          %394 = vst [vmem:[#allocation2 + $0x8] sm:$0xff] 0.0
          %395 = vst [vmem:[#allocation2 + $0x10] sm:$0xff] 0.0
          %396 = vst [vmem:[#allocation2 + $0x18] sm:$0xff] 0.0
          %397 = vst [vmem:[#allocation2 + $0x20] sm:$0xff] 0.0
          %398 = vst [vmem:[#allocation2 + $0x28] sm:$0xff] 0.0
          %399 = vst [vmem:[#allocation2 + $0x30] sm:$0xff] 0.0
          %400 = vst [vmem:[#allocation2 + $0x38] sm:$0xff] 0.0
          %401 = vst [vmem:[#allocation2 + $0x40] sm:$0xff] 0.0
          %402 = vst [vmem:[#allocation2 + $0x48] sm:$0xff] 0.0
          %403 = vst [vmem:[#allocation2 + $0x50] sm:$0xff] 0.0
          %404 = vst [vmem:[#allocation2 + $0x58] sm:$0xff] 0.0
          %405 = vst [vmem:[#allocation2 + $0x60] sm:$0xff] 0.0
          %406 = vst [vmem:[#allocation2 + $0x68] sm:$0xff] 0.0
          %407 = vst [vmem:[#allocation2 + $0x70] sm:$0xff] 0.0
          %408 = vst [vmem:[#allocation2 + $0x78] sm:$0xff] 0.0
          %409 = vst [vmem:[#allocation2 + $0x80] sm:$0xff] 0.0
          %410 = vst [vmem:[#allocation2 + $0x88] sm:$0xff] 0.0
          %411 = vst [vmem:[#allocation2 + $0x90] sm:$0xff] 0.0
          %412 = vst [vmem:[#allocation2 + $0x98] sm:$0xff] 0.0
          %413 = vst [vmem:[#allocation2 + $0xa0] sm:$0xff] 0.0
          %414 = vst [vmem:[#allocation2 + $0xa8] sm:$0xff] 0.0
          %415 = vst [vmem:[#allocation2 + $0xb0] sm:$0xff] 0.0
          %416 = vst [vmem:[#allocation2 + $0xb8] sm:$0xff] 0.0
          %417 = vst [vmem:[#allocation2 + $0xc0] sm:$0xff] 0.0
          %418 = vst [vmem:[#allocation2 + $0xc8] sm:$0xff] 0.0
          %419 = vst [vmem:[#allocation2 + $0xd0] sm:$0xff] 0.0
          %420 = vst [vmem:[#allocation2 + $0xd8] sm:$0xff] 0.0
          %421 = vst [vmem:[#allocation2 + $0xe0] sm:$0xff] 0.0
          %422 = vst [vmem:[#allocation2 + $0xe8] sm:$0xff] 0.0
          %423 = vst [vmem:[#allocation2 + $0xf0] sm:$0xff] 0.0
          %424 = vst [vmem:[#allocation2 + $0xf8] sm:$0xff] 0.0
          %425 = vst [vmem:[#allocation2 + $0x100] sm:$0xff] 0.0
          %426 = vst [vmem:[#allocation2 + $0x108] sm:$0xff] 0.0
          %427 = vst [vmem:[#allocation2 + $0x110] sm:$0xff] 0.0
          %428 = vst [vmem:[#allocation2 + $0x118] sm:$0xff] 0.0
          %429 = vst [vmem:[#allocation2 + $0x120] sm:$0xff] 0.0
          %430 = vst [vmem:[#allocation2 + $0x128] sm:$0xff] 0.0
          %431 = vst [vmem:[#allocation2 + $0x130] sm:$0xff] 0.0
          %432 = vst [vmem:[#allocation2 + $0x138] sm:$0xff] 0.0
          %433 = vst [vmem:[#allocation2 + $0x140] sm:$0xff] 0.0
          %434 = vst [vmem:[#allocation2 + $0x148] sm:$0xff] 0.0
          %435 = vst [vmem:[#allocation2 + $0x150] sm:$0xff] 0.0
          %436 = vst [vmem:[#allocation2 + $0x158] sm:$0xff] 0.0
          %437 = vst [vmem:[#allocation2 + $0x160] sm:$0xff] 0.0
          %438 = vst [vmem:[#allocation2 + $0x168] sm:$0xff] 0.0
          %439 = vst [vmem:[#allocation2 + $0x170] sm:$0xff] 0.0
          %440 = vst [vmem:[#allocation2 + $0x178] sm:$0xff] 0.0
          %441 = vst [vmem:[#allocation2 + $0x180] sm:$0xff] 0.0
          %442 = vst [vmem:[#allocation2 + $0x188] sm:$0xff] 0.0
          %443 = vst [vmem:[#allocation2 + $0x190] sm:$0xff] 0.0
          %444 = vst [vmem:[#allocation2 + $0x198] sm:$0xff] 0.0
          %445 = vst [vmem:[#allocation2 + $0x1a0] sm:$0xff] 0.0
          %446 = vst [vmem:[#allocation2 + $0x1a8] sm:$0xff] 0.0
          %447 = vst [vmem:[#allocation2 + $0x1b0] sm:$0xff] 0.0
          %448 = vst [vmem:[#allocation2 + $0x1b8] sm:$0xff] 0.0
          %449 = vst [vmem:[#allocation2 + $0x1c0] sm:$0xff] 0.0
          %450 = vst [vmem:[#allocation2 + $0x1c8] sm:$0xff] 0.0
          %451 = vst [vmem:[#allocation2 + $0x1d0] sm:$0xff] 0.0
          %452 = vst [vmem:[#allocation2 + $0x1d8] sm:$0xff] 0.0
          %453 = vst [vmem:[#allocation2 + $0x1e0] sm:$0xff] 0.0
          %454 = vst [vmem:[#allocation2 + $0x1e8] sm:$0xff] 0.0
          %455 = vst [vmem:[#allocation2 + $0x1f0] sm:$0xff] 0.0
          %456 = vst [vmem:[#allocation2 + $0x1f8] sm:$0xff] 0.0
        $region60: #{tpu_custom_call.1} parent=35 // pred_fallthru
          _
        %v457 = vld [vmem:[#allocation2] sm:$0xff]
        %v458 = vld [vmem:[#allocation2 + $0x8] sm:$0xff]
        %v459 = vld [vmem:[#allocation2 + $0x10] sm:$0xff]
        %v460 = vld [vmem:[#allocation2 + $0x18] sm:$0xff]
        %v461 = vld [vmem:[#allocation2 + $0x20] sm:$0xff]
        %v462 = vld [vmem:[#allocation2 + $0x28] sm:$0xff]
        %v463 = vld [vmem:[#allocation2 + $0x30] sm:$0xff]
        %v464 = vld [vmem:[#allocation2 + $0x38] sm:$0xff]
        %v465 = vld [vmem:[#allocation2 + $0x40] sm:$0xff]
        %v466 = vld [vmem:[#allocation2 + $0x48] sm:$0xff]
        %v467 = vld [vmem:[#allocation2 + $0x50] sm:$0xff]
        %v468 = vld [vmem:[#allocation2 + $0x58] sm:$0xff]
        %v469 = vld [vmem:[#allocation2 + $0x60] sm:$0xff]
        %v470 = vld [vmem:[#allocation2 + $0x68] sm:$0xff]
        %v471 = vld [vmem:[#allocation2 + $0x70] sm:$0xff]
        %v472 = vld [vmem:[#allocation2 + $0x78] sm:$0xff]
        %v473 = vld [vmem:[#allocation2 + $0x80] sm:$0xff]
        %v474 = vld [vmem:[#allocation2 + $0x88] sm:$0xff]
        %v475 = vld [vmem:[#allocation2 + $0x90] sm:$0xff]
        %v476 = vld [vmem:[#allocation2 + $0x98] sm:$0xff]
        %v477 = vld [vmem:[#allocation2 + $0xa0] sm:$0xff]
        %v478 = vld [vmem:[#allocation2 + $0xa8] sm:$0xff]
        %v479 = vld [vmem:[#allocation2 + $0xb0] sm:$0xff]
        %v480 = vld [vmem:[#allocation2 + $0xb8] sm:$0xff]
        %v481 = vld [vmem:[#allocation2 + $0xc0] sm:$0xff]
        %v482 = vld [vmem:[#allocation2 + $0xc8] sm:$0xff]
        %v483 = vld [vmem:[#allocation2 + $0xd0] sm:$0xff]
        %v484 = vld [vmem:[#allocation2 + $0xd8] sm:$0xff]
        %v485 = vld [vmem:[#allocation2 + $0xe0] sm:$0xff]
        %v486 = vld [vmem:[#allocation2 + $0xe8] sm:$0xff]
        %v487 = vld [vmem:[#allocation2 + $0xf0] sm:$0xff]
        %v488 = vld [vmem:[#allocation2 + $0xf8] sm:$0xff]
        %v489 = vld [vmem:[#allocation2 + $0x100] sm:$0xff]
        %v490 = vld [vmem:[#allocation2 + $0x108] sm:$0xff]
        %v491 = vld [vmem:[#allocation2 + $0x110] sm:$0xff]
        %v492 = vld [vmem:[#allocation2 + $0x118] sm:$0xff]
        %v493 = vld [vmem:[#allocation2 + $0x120] sm:$0xff]
        %v494 = vld [vmem:[#allocation2 + $0x128] sm:$0xff]
        %v495 = vld [vmem:[#allocation2 + $0x130] sm:$0xff]
        %v496 = vld [vmem:[#allocation2 + $0x138] sm:$0xff]
        %v497 = vld [vmem:[#allocation2 + $0x140] sm:$0xff]
        %v498 = vld [vmem:[#allocation2 + $0x148] sm:$0xff]
        %v499 = vld [vmem:[#allocation2 + $0x150] sm:$0xff]
        %v500 = vld [vmem:[#allocation2 + $0x158] sm:$0xff]
        %v501 = vld [vmem:[#allocation2 + $0x160] sm:$0xff]
        %v502 = vld [vmem:[#allocation2 + $0x168] sm:$0xff]
        %v503 = vld [vmem:[#allocation2 + $0x170] sm:$0xff]
        %v504 = vld [vmem:[#allocation2 + $0x178] sm:$0xff]
        %v505 = vld [vmem:[#allocation2 + $0x180] sm:$0xff]
        %v506 = vld [vmem:[#allocation2 + $0x188] sm:$0xff]
        %v507 = vld [vmem:[#allocation2 + $0x190] sm:$0xff]
        %v508 = vld [vmem:[#allocation2 + $0x198] sm:$0xff]
        %v509 = vld [vmem:[#allocation2 + $0x1a0] sm:$0xff]
        %v510 = vld [vmem:[#allocation2 + $0x1a8] sm:$0xff]
        %v511 = vld [vmem:[#allocation2 + $0x1b0] sm:$0xff]
        %v512 = vld [vmem:[#allocation2 + $0x1b8] sm:$0xff]
        %v513 = vld [vmem:[#allocation2 + $0x1c0] sm:$0xff]
        %v514 = vld [vmem:[#allocation2 + $0x1c8] sm:$0xff]
        %v515 = vld [vmem:[#allocation2 + $0x1d0] sm:$0xff]
        %v516 = vld [vmem:[#allocation2 + $0x1d8] sm:$0xff]
        %v517 = vld [vmem:[#allocation2 + $0x1e0] sm:$0xff]
        %v518 = vld [vmem:[#allocation2 + $0x1e8] sm:$0xff]
        %v519 = vld [vmem:[#allocation2 + $0x1f0] sm:$0xff]
        %v520 = vld [vmem:[#allocation2 + $0x1f8] sm:$0xff]
        %v521 = vld [vmem:[%s293] sm:$0xff]
        %v522 = vld [vmem:[%s293 + $0x8] sm:$0xff]
        %v523 = vld [vmem:[%s293 + $0x10] sm:$0xff]
        %v524 = vld [vmem:[%s293 + $0x18] sm:$0xff]
        %v525 = vld [vmem:[%s293 + $0x20] sm:$0xff]
        %v526 = vld [vmem:[%s293 + $0x28] sm:$0xff]
        %v527 = vld [vmem:[%s293 + $0x30] sm:$0xff]
        %v528 = vld [vmem:[%s293 + $0x38] sm:$0xff]
        %v529 = vld [vmem:[%s293 + $0x40] sm:$0xff]
        %v530 = vld [vmem:[%s293 + $0x48] sm:$0xff]
        %v531 = vld [vmem:[%s293 + $0x50] sm:$0xff]
        %v532 = vld [vmem:[%s293 + $0x58] sm:$0xff]
        %v533 = vld [vmem:[%s293 + $0x60] sm:$0xff]
        %v534 = vld [vmem:[%s293 + $0x68] sm:$0xff]
        %v535 = vld [vmem:[%s293 + $0x70] sm:$0xff]
        %v536 = vld [vmem:[%s293 + $0x78] sm:$0xff]
        %v537 = vld [vmem:[%s293 + $0x80] sm:$0xff]
        %v538 = vld [vmem:[%s293 + $0x88] sm:$0xff]
        %v539 = vld [vmem:[%s293 + $0x90] sm:$0xff]
        %v540 = vld [vmem:[%s293 + $0x98] sm:$0xff]
        %v541 = vld [vmem:[%s293 + $0xa0] sm:$0xff]
        %v542 = vld [vmem:[%s293 + $0xa8] sm:$0xff]
        %v543 = vld [vmem:[%s293 + $0xb0] sm:$0xff]
        %v544 = vld [vmem:[%s293 + $0xb8] sm:$0xff]
        %v545 = vld [vmem:[%s293 + $0xc0] sm:$0xff]
        %v546 = vld [vmem:[%s293 + $0xc8] sm:$0xff]
        %v547 = vld [vmem:[%s293 + $0xd0] sm:$0xff]
        %v548 = vld [vmem:[%s293 + $0xd8] sm:$0xff]
        %v549 = vld [vmem:[%s293 + $0xe0] sm:$0xff]
        %v550 = vld [vmem:[%s293 + $0xe8] sm:$0xff]
        %v551 = vld [vmem:[%s293 + $0xf0] sm:$0xff]
        %v552 = vld [vmem:[%s293 + $0xf8] sm:$0xff]
        %v553 = vld [vmem:[%s302] sm:$0xff]
        %v554 = vld [vmem:[%s302 + $0x8] sm:$0xff]
        %v555 = vld [vmem:[%s302 + $0x10] sm:$0xff]
        %v556 = vld [vmem:[%s302 + $0x18] sm:$0xff]
        %v557 = vld [vmem:[%s302 + $0x20] sm:$0xff]
        %v558 = vld [vmem:[%s302 + $0x28] sm:$0xff]
        %v559 = vld [vmem:[%s302 + $0x30] sm:$0xff]
        %v560 = vld [vmem:[%s302 + $0x38] sm:$0xff]
        %v561 = vld [vmem:[%s302 + $0x40] sm:$0xff]
        %v562 = vld [vmem:[%s302 + $0x48] sm:$0xff]
        %v563 = vld [vmem:[%s302 + $0x50] sm:$0xff]
        %v564 = vld [vmem:[%s302 + $0x58] sm:$0xff]
        %v565 = vld [vmem:[%s302 + $0x60] sm:$0xff]
        %v566 = vld [vmem:[%s302 + $0x68] sm:$0xff]
        %v567 = vld [vmem:[%s302 + $0x70] sm:$0xff]
        %v568 = vld [vmem:[%s302 + $0x78] sm:$0xff]
        %v569 = vld [vmem:[%s302 + $0x80] sm:$0xff]
        %v570 = vld [vmem:[%s302 + $0x88] sm:$0xff]
        %v571 = vld [vmem:[%s302 + $0x90] sm:$0xff]
        %v572 = vld [vmem:[%s302 + $0x98] sm:$0xff]
        %v573 = vld [vmem:[%s302 + $0xa0] sm:$0xff]
        %v574 = vld [vmem:[%s302 + $0xa8] sm:$0xff]
        %v575 = vld [vmem:[%s302 + $0xb0] sm:$0xff]
        %v576 = vld [vmem:[%s302 + $0xb8] sm:$0xff]
        %v577 = vld [vmem:[%s302 + $0xc0] sm:$0xff]
        %v578 = vld [vmem:[%s302 + $0xc8] sm:$0xff]
        %v579 = vld [vmem:[%s302 + $0xd0] sm:$0xff]
        %v580 = vld [vmem:[%s302 + $0xd8] sm:$0xff]
        %v581 = vld [vmem:[%s302 + $0xe0] sm:$0xff]
        %v582 = vld [vmem:[%s302 + $0xe8] sm:$0xff]
        %v583 = vld [vmem:[%s302 + $0xf0] sm:$0xff]
        %v584 = vld [vmem:[%s302 + $0xf8] sm:$0xff]
        %v585 = vld [vmem:[%s302 + $0x100] sm:$0xff]
        %v586 = vld [vmem:[%s302 + $0x108] sm:$0xff]
        %v587 = vld [vmem:[%s302 + $0x110] sm:$0xff]
        %v588 = vld [vmem:[%s302 + $0x118] sm:$0xff]
        %v589 = vld [vmem:[%s302 + $0x120] sm:$0xff]
        %v590 = vld [vmem:[%s302 + $0x128] sm:$0xff]
        %v591 = vld [vmem:[%s302 + $0x130] sm:$0xff]
        %v592 = vld [vmem:[%s302 + $0x138] sm:$0xff]
        %v593 = vld [vmem:[%s302 + $0x140] sm:$0xff]
        %v594 = vld [vmem:[%s302 + $0x148] sm:$0xff]
        %v595 = vld [vmem:[%s302 + $0x150] sm:$0xff]
        %v596 = vld [vmem:[%s302 + $0x158] sm:$0xff]
        %v597 = vld [vmem:[%s302 + $0x160] sm:$0xff]
        %v598 = vld [vmem:[%s302 + $0x168] sm:$0xff]
        %v599 = vld [vmem:[%s302 + $0x170] sm:$0xff]
        %v600 = vld [vmem:[%s302 + $0x178] sm:$0xff]
        %v601 = vld [vmem:[%s302 + $0x180] sm:$0xff]
        %v602 = vld [vmem:[%s302 + $0x188] sm:$0xff]
        %v603 = vld [vmem:[%s302 + $0x190] sm:$0xff]
        %v604 = vld [vmem:[%s302 + $0x198] sm:$0xff]
        %v605 = vld [vmem:[%s302 + $0x1a0] sm:$0xff]
        %v606 = vld [vmem:[%s302 + $0x1a8] sm:$0xff]
        %v607 = vld [vmem:[%s302 + $0x1b0] sm:$0xff]
        %v608 = vld [vmem:[%s302 + $0x1b8] sm:$0xff]
        %v609 = vld [vmem:[%s302 + $0x1c0] sm:$0xff]
        %v610 = vld [vmem:[%s302 + $0x1c8] sm:$0xff]
        %v611 = vld [vmem:[%s302 + $0x1d0] sm:$0xff]
        %v612 = vld [vmem:[%s302 + $0x1d8] sm:$0xff]
        %v613 = vld [vmem:[%s302 + $0x1e0] sm:$0xff]
        %v614 = vld [vmem:[%s302 + $0x1e8] sm:$0xff]
        %v615 = vld [vmem:[%s302 + $0x1f0] sm:$0xff]
        %v616 = vld [vmem:[%s302 + $0x1f8] sm:$0xff]
        %v617 = vld [vmem:[%s302 + $0x200] sm:$0xff]
        %v618 = vld [vmem:[%s302 + $0x208] sm:$0xff]
        %v619 = vld [vmem:[%s302 + $0x210] sm:$0xff]
        %v620 = vld [vmem:[%s302 + $0x218] sm:$0xff]
        %v621 = vld [vmem:[%s302 + $0x220] sm:$0xff]
        %v622 = vld [vmem:[%s302 + $0x228] sm:$0xff]
        %v623 = vld [vmem:[%s302 + $0x230] sm:$0xff]
        %v624 = vld [vmem:[%s302 + $0x238] sm:$0xff]
        %v625 = vld [vmem:[%s302 + $0x240] sm:$0xff]
        %v626 = vld [vmem:[%s302 + $0x248] sm:$0xff]
        %v627 = vld [vmem:[%s302 + $0x250] sm:$0xff]
        %v628 = vld [vmem:[%s302 + $0x258] sm:$0xff]
        %v629 = vld [vmem:[%s302 + $0x260] sm:$0xff]
        %v630 = vld [vmem:[%s302 + $0x268] sm:$0xff]
        %v631 = vld [vmem:[%s302 + $0x270] sm:$0xff]
        %v632 = vld [vmem:[%s302 + $0x278] sm:$0xff]
        %v633 = vld [vmem:[%s302 + $0x280] sm:$0xff]
        %v634 = vld [vmem:[%s302 + $0x288] sm:$0xff]
        %v635 = vld [vmem:[%s302 + $0x290] sm:$0xff]
        %v636 = vld [vmem:[%s302 + $0x298] sm:$0xff]
        %v637 = vld [vmem:[%s302 + $0x2a0] sm:$0xff]
        %v638 = vld [vmem:[%s302 + $0x2a8] sm:$0xff]
        %v639 = vld [vmem:[%s302 + $0x2b0] sm:$0xff]
        %v640 = vld [vmem:[%s302 + $0x2b8] sm:$0xff]
        %v641 = vld [vmem:[%s302 + $0x2c0] sm:$0xff]
        %v642 = vld [vmem:[%s302 + $0x2c8] sm:$0xff]
        %v643 = vld [vmem:[%s302 + $0x2d0] sm:$0xff]
        %v644 = vld [vmem:[%s302 + $0x2d8] sm:$0xff]
        %v645 = vld [vmem:[%s302 + $0x2e0] sm:$0xff]
        %v646 = vld [vmem:[%s302 + $0x2e8] sm:$0xff]
        %v647 = vld [vmem:[%s302 + $0x2f0] sm:$0xff]
        %v648 = vld [vmem:[%s302 + $0x2f8] sm:$0xff]
        %v649 = vld [vmem:[%s302 + $0x300] sm:$0xff]
        %v650 = vld [vmem:[%s302 + $0x308] sm:$0xff]
        %v651 = vld [vmem:[%s302 + $0x310] sm:$0xff]
        %v652 = vld [vmem:[%s302 + $0x318] sm:$0xff]
        %v653 = vld [vmem:[%s302 + $0x320] sm:$0xff]
        %v654 = vld [vmem:[%s302 + $0x328] sm:$0xff]
        %v655 = vld [vmem:[%s302 + $0x330] sm:$0xff]
        %v656 = vld [vmem:[%s302 + $0x338] sm:$0xff]
        %v657 = vld [vmem:[%s302 + $0x340] sm:$0xff]
        %v658 = vld [vmem:[%s302 + $0x348] sm:$0xff]
        %v659 = vld [vmem:[%s302 + $0x350] sm:$0xff]
        %v660 = vld [vmem:[%s302 + $0x358] sm:$0xff]
        %v661 = vld [vmem:[%s302 + $0x360] sm:$0xff]
        %v662 = vld [vmem:[%s302 + $0x368] sm:$0xff]
        %v663 = vld [vmem:[%s302 + $0x370] sm:$0xff]
        %v664 = vld [vmem:[%s302 + $0x378] sm:$0xff]
        %v665 = vld [vmem:[%s302 + $0x380] sm:$0xff]
        %v666 = vld [vmem:[%s302 + $0x388] sm:$0xff]
        %v667 = vld [vmem:[%s302 + $0x390] sm:$0xff]
        %v668 = vld [vmem:[%s302 + $0x398] sm:$0xff]
        %v669 = vld [vmem:[%s302 + $0x3a0] sm:$0xff]
        %v670 = vld [vmem:[%s302 + $0x3a8] sm:$0xff]
        %v671 = vld [vmem:[%s302 + $0x3b0] sm:$0xff]
        %v672 = vld [vmem:[%s302 + $0x3b8] sm:$0xff]
        %v673 = vld [vmem:[%s302 + $0x3c0] sm:$0xff]
        %v674 = vld [vmem:[%s302 + $0x3c8] sm:$0xff]
        %v675 = vld [vmem:[%s302 + $0x3d0] sm:$0xff]
        %v676 = vld [vmem:[%s302 + $0x3d8] sm:$0xff]
        %v677 = vld [vmem:[%s302 + $0x3e0] sm:$0xff]
        %v678 = vld [vmem:[%s302 + $0x3e8] sm:$0xff]
        %v679 = vld [vmem:[%s302 + $0x3f0] sm:$0xff]
        %v680 = vld [vmem:[%s302 + $0x3f8] sm:$0xff]
        %v713 = vunpack.c.l.b16 %v521
        %v714 = vunpack.c.h.b16 %v521
        %v715 = vunpack.c.l.b16 %v522
        %v716 = vunpack.c.h.b16 %v522
        %v717 = vunpack.c.l.b16 %v523
        %v718 = vunpack.c.h.b16 %v523
        %v719 = vunpack.c.l.b16 %v524
        %v720 = vunpack.c.h.b16 %v524
        %v721 = vunpack.c.l.b16 %v525
        %v722 = vunpack.c.h.b16 %v525
        %v723 = vunpack.c.l.b16 %v526
        %v724 = vunpack.c.h.b16 %v526
        %v725 = vunpack.c.l.b16 %v527
        %v726 = vunpack.c.h.b16 %v527
        %v727 = vunpack.c.l.b16 %v528
        %v728 = vunpack.c.h.b16 %v528
        %v729 = vunpack.c.l.b16 %v529
        %v730 = vunpack.c.h.b16 %v529
        %v731 = vunpack.c.l.b16 %v530
        %v732 = vunpack.c.h.b16 %v530
        %v733 = vunpack.c.l.b16 %v531
        %v734 = vunpack.c.h.b16 %v531
        %v735 = vunpack.c.l.b16 %v532
        %v736 = vunpack.c.h.b16 %v532
        %v737 = vunpack.c.l.b16 %v533
        %v738 = vunpack.c.h.b16 %v533
        %v739 = vunpack.c.l.b16 %v534
        %v740 = vunpack.c.h.b16 %v534
        %v741 = vunpack.c.l.b16 %v535
        %v742 = vunpack.c.h.b16 %v535
        %v743 = vunpack.c.l.b16 %v536
        %v744 = vunpack.c.h.b16 %v536
        %v745 = vunpack.c.l.b16 %v537
        %v746 = vunpack.c.h.b16 %v537
        %v747 = vunpack.c.l.b16 %v538
        %v748 = vunpack.c.h.b16 %v538
        %v749 = vunpack.c.l.b16 %v539
        %v750 = vunpack.c.h.b16 %v539
        %v751 = vunpack.c.l.b16 %v540
        %v752 = vunpack.c.h.b16 %v540
        %v753 = vunpack.c.l.b16 %v541
        %v754 = vunpack.c.h.b16 %v541
        %v755 = vunpack.c.l.b16 %v542
        %v756 = vunpack.c.h.b16 %v542
        %v757 = vunpack.c.l.b16 %v543
        %v758 = vunpack.c.h.b16 %v543
        %v759 = vunpack.c.l.b16 %v544
        %v760 = vunpack.c.h.b16 %v544
        %v761 = vunpack.c.l.b16 %v545
        %v762 = vunpack.c.h.b16 %v545
        %v763 = vunpack.c.l.b16 %v546
        %v764 = vunpack.c.h.b16 %v546
        %v765 = vunpack.c.l.b16 %v547
        %v766 = vunpack.c.h.b16 %v547
        %v767 = vunpack.c.l.b16 %v548
        %v768 = vunpack.c.h.b16 %v548
        %v769 = vunpack.c.l.b16 %v549
        %v770 = vunpack.c.h.b16 %v549
        %v771 = vunpack.c.l.b16 %v550
        %v772 = vunpack.c.h.b16 %v550
        %v773 = vunpack.c.l.b16 %v551
        %v774 = vunpack.c.h.b16 %v551
        %v775 = vunpack.c.l.b16 %v552
        %v776 = vunpack.c.h.b16 %v552
        %v777 = vpack.c.b16 %v717, %v713
        %v778 = vpack.c.b16 %v718, %v714
        %v779 = vpack.c.b16 %v719, %v715
        %v780 = vpack.c.b16 %v720, %v716
        %v781 = vpack.c.b16 %v725, %v721
        %v782 = vpack.c.b16 %v726, %v722
        %v783 = vpack.c.b16 %v727, %v723
        %v784 = vpack.c.b16 %v728, %v724
        %v785 = vpack.c.b16 %v733, %v729
        %v786 = vpack.c.b16 %v734, %v730
        %v787 = vpack.c.b16 %v735, %v731
        %v788 = vpack.c.b16 %v736, %v732
        %v789 = vpack.c.b16 %v741, %v737
        %v790 = vpack.c.b16 %v742, %v738
        %v791 = vpack.c.b16 %v743, %v739
        %v792 = vpack.c.b16 %v744, %v740
        %v793 = vpack.c.b16 %v749, %v745
        %v794 = vpack.c.b16 %v750, %v746
        %v795 = vpack.c.b16 %v751, %v747
        %v796 = vpack.c.b16 %v752, %v748
        %v797 = vpack.c.b16 %v757, %v753
        %v798 = vpack.c.b16 %v758, %v754
        %v799 = vpack.c.b16 %v759, %v755
        %v800 = vpack.c.b16 %v760, %v756
        %v801 = vpack.c.b16 %v765, %v761
        %v802 = vpack.c.b16 %v766, %v762
        %v803 = vpack.c.b16 %v767, %v763
        %v804 = vpack.c.b16 %v768, %v764
        %v805 = vpack.c.b16 %v773, %v769
        %v806 = vpack.c.b16 %v774, %v770
        %v807 = vpack.c.b16 %v775, %v771
        %v808 = vpack.c.b16 %v776, %v772
        %v969 = vunpack.c.l.b16 %v553
        %v970 = vunpack.c.h.b16 %v553
        %v971 = vunpack.c.l.b16 %v554
        %v972 = vunpack.c.h.b16 %v554
        %v973 = vunpack.c.l.b16 %v555
        %v974 = vunpack.c.h.b16 %v555
        %v975 = vunpack.c.l.b16 %v556
        %v976 = vunpack.c.h.b16 %v556
        %v977 = vunpack.c.l.b16 %v557
        %v978 = vunpack.c.h.b16 %v557
        %v979 = vunpack.c.l.b16 %v558
        %v980 = vunpack.c.h.b16 %v558
        %v981 = vunpack.c.l.b16 %v559
        %v982 = vunpack.c.h.b16 %v559
        %v983 = vunpack.c.l.b16 %v560
        %v984 = vunpack.c.h.b16 %v560
        %v985 = vunpack.c.l.b16 %v561
        %v986 = vunpack.c.h.b16 %v561
        %v987 = vunpack.c.l.b16 %v562
        %v988 = vunpack.c.h.b16 %v562
        %v989 = vunpack.c.l.b16 %v563
        %v990 = vunpack.c.h.b16 %v563
        %v991 = vunpack.c.l.b16 %v564
        %v992 = vunpack.c.h.b16 %v564
        %v993 = vunpack.c.l.b16 %v565
        %v994 = vunpack.c.h.b16 %v565
        %v995 = vunpack.c.l.b16 %v566
        %v996 = vunpack.c.h.b16 %v566
        %v997 = vunpack.c.l.b16 %v567
        %v998 = vunpack.c.h.b16 %v567
        %v999 = vunpack.c.l.b16 %v568
        %v1000 = vunpack.c.h.b16 %v568
        %v1001 = vunpack.c.l.b16 %v569
        %v1002 = vunpack.c.h.b16 %v569
        %v1003 = vunpack.c.l.b16 %v570
        %v1004 = vunpack.c.h.b16 %v570
        %v1005 = vunpack.c.l.b16 %v571
        %v1006 = vunpack.c.h.b16 %v571
        %v1007 = vunpack.c.l.b16 %v572
        %v1008 = vunpack.c.h.b16 %v572
        %v1009 = vunpack.c.l.b16 %v573
        %v1010 = vunpack.c.h.b16 %v573
        %v1011 = vunpack.c.l.b16 %v574
        %v1012 = vunpack.c.h.b16 %v574
        %v1013 = vunpack.c.l.b16 %v575
        %v1014 = vunpack.c.h.b16 %v575
        %v1015 = vunpack.c.l.b16 %v576
        %v1016 = vunpack.c.h.b16 %v576
        %v1017 = vunpack.c.l.b16 %v577
        %v1018 = vunpack.c.h.b16 %v577
        %v1019 = vunpack.c.l.b16 %v578
        %v1020 = vunpack.c.h.b16 %v578
        %v1021 = vunpack.c.l.b16 %v579
        %v1022 = vunpack.c.h.b16 %v579
        %v1023 = vunpack.c.l.b16 %v580
        %v1024 = vunpack.c.h.b16 %v580
        %v1025 = vunpack.c.l.b16 %v581
        %v1026 = vunpack.c.h.b16 %v581
        %v1027 = vunpack.c.l.b16 %v582
        %v1028 = vunpack.c.h.b16 %v582
        %v1029 = vunpack.c.l.b16 %v583
        %v1030 = vunpack.c.h.b16 %v583
        %v1031 = vunpack.c.l.b16 %v584
        %v1032 = vunpack.c.h.b16 %v584
        %v1033 = vunpack.c.l.b16 %v585
        %v1034 = vunpack.c.h.b16 %v585
        %v1035 = vunpack.c.l.b16 %v586
        %v1036 = vunpack.c.h.b16 %v586
        %v1037 = vunpack.c.l.b16 %v587
        %v1038 = vunpack.c.h.b16 %v587
        %v1039 = vunpack.c.l.b16 %v588
        %v1040 = vunpack.c.h.b16 %v588
        %v1041 = vunpack.c.l.b16 %v589
        %v1042 = vunpack.c.h.b16 %v589
        %v1043 = vunpack.c.l.b16 %v590
        %v1044 = vunpack.c.h.b16 %v590
        %v1045 = vunpack.c.l.b16 %v591
        %v1046 = vunpack.c.h.b16 %v591
        %v1047 = vunpack.c.l.b16 %v592
        %v1048 = vunpack.c.h.b16 %v592
        %v1049 = vunpack.c.l.b16 %v593
        %v1050 = vunpack.c.h.b16 %v593
        %v1051 = vunpack.c.l.b16 %v594
        %v1052 = vunpack.c.h.b16 %v594
        %v1053 = vunpack.c.l.b16 %v595
        %v1054 = vunpack.c.h.b16 %v595
        %v1055 = vunpack.c.l.b16 %v596
        %v1056 = vunpack.c.h.b16 %v596
        %v1057 = vunpack.c.l.b16 %v597
        %v1058 = vunpack.c.h.b16 %v597
        %v1059 = vunpack.c.l.b16 %v598
        %v1060 = vunpack.c.h.b16 %v598
        %v1061 = vunpack.c.l.b16 %v599
        %v1062 = vunpack.c.h.b16 %v599
        %v1063 = vunpack.c.l.b16 %v600
        %v1064 = vunpack.c.h.b16 %v600
        %v1065 = vunpack.c.l.b16 %v601
        %v1066 = vunpack.c.h.b16 %v601
        %v1067 = vunpack.c.l.b16 %v602
        %v1068 = vunpack.c.h.b16 %v602
        %v1069 = vunpack.c.l.b16 %v603
        %v1070 = vunpack.c.h.b16 %v603
        %v1071 = vunpack.c.l.b16 %v604
        %v1072 = vunpack.c.h.b16 %v604
        %v1073 = vunpack.c.l.b16 %v605
        %v1074 = vunpack.c.h.b16 %v605
        %v1075 = vunpack.c.l.b16 %v606
        %v1076 = vunpack.c.h.b16 %v606
        %v1077 = vunpack.c.l.b16 %v607
        %v1078 = vunpack.c.h.b16 %v607
        %v1079 = vunpack.c.l.b16 %v608
        %v1080 = vunpack.c.h.b16 %v608
        %v1081 = vunpack.c.l.b16 %v609
        %v1082 = vunpack.c.h.b16 %v609
        %v1083 = vunpack.c.l.b16 %v610
        %v1084 = vunpack.c.h.b16 %v610
        %v1085 = vunpack.c.l.b16 %v611
        %v1086 = vunpack.c.h.b16 %v611
        %v1087 = vunpack.c.l.b16 %v612
        %v1088 = vunpack.c.h.b16 %v612
        %v1089 = vunpack.c.l.b16 %v613
        %v1090 = vunpack.c.h.b16 %v613
        %v1091 = vunpack.c.l.b16 %v614
        %v1092 = vunpack.c.h.b16 %v614
        %v1093 = vunpack.c.l.b16 %v615
        %v1094 = vunpack.c.h.b16 %v615
        %v1095 = vunpack.c.l.b16 %v616
        %v1096 = vunpack.c.h.b16 %v616
        %v1097 = vunpack.c.l.b16 %v617
        %v1098 = vunpack.c.h.b16 %v617
        %v1099 = vunpack.c.l.b16 %v618
        %v1100 = vunpack.c.h.b16 %v618
        %v1101 = vunpack.c.l.b16 %v619
        %v1102 = vunpack.c.h.b16 %v619
        %v1103 = vunpack.c.l.b16 %v620
        %v1104 = vunpack.c.h.b16 %v620
        %v1105 = vunpack.c.l.b16 %v621
        %v1106 = vunpack.c.h.b16 %v621
        %v1107 = vunpack.c.l.b16 %v622
        %v1108 = vunpack.c.h.b16 %v622
        %v1109 = vunpack.c.l.b16 %v623
        %v1110 = vunpack.c.h.b16 %v623
        %v1111 = vunpack.c.l.b16 %v624
        %v1112 = vunpack.c.h.b16 %v624
        %v1113 = vunpack.c.l.b16 %v625
        %v1114 = vunpack.c.h.b16 %v625
        %v1115 = vunpack.c.l.b16 %v626
        %v1116 = vunpack.c.h.b16 %v626
        %v1117 = vunpack.c.l.b16 %v627
        %v1118 = vunpack.c.h.b16 %v627
        %v1119 = vunpack.c.l.b16 %v628
        %v1120 = vunpack.c.h.b16 %v628
        %v1121 = vunpack.c.l.b16 %v629
        %v1122 = vunpack.c.h.b16 %v629
        %v1123 = vunpack.c.l.b16 %v630
        %v1124 = vunpack.c.h.b16 %v630
        %v1125 = vunpack.c.l.b16 %v631
        %v1126 = vunpack.c.h.b16 %v631
        %v1127 = vunpack.c.l.b16 %v632
        %v1128 = vunpack.c.h.b16 %v632
        %v1129 = vunpack.c.l.b16 %v633
        %v1130 = vunpack.c.h.b16 %v633
        %v1131 = vunpack.c.l.b16 %v634
        %v1132 = vunpack.c.h.b16 %v634
        %v1133 = vunpack.c.l.b16 %v635
        %v1134 = vunpack.c.h.b16 %v635
        %v1135 = vunpack.c.l.b16 %v636
        %v1136 = vunpack.c.h.b16 %v636
        %v1137 = vunpack.c.l.b16 %v637
        %v1138 = vunpack.c.h.b16 %v637
        %v1139 = vunpack.c.l.b16 %v638
        %v1140 = vunpack.c.h.b16 %v638
        %v1141 = vunpack.c.l.b16 %v639
        %v1142 = vunpack.c.h.b16 %v639
        %v1143 = vunpack.c.l.b16 %v640
        %v1144 = vunpack.c.h.b16 %v640
        %v1145 = vunpack.c.l.b16 %v641
        %v1146 = vunpack.c.h.b16 %v641
        %v1147 = vunpack.c.l.b16 %v642
        %v1148 = vunpack.c.h.b16 %v642
        %v1149 = vunpack.c.l.b16 %v643
        %v1150 = vunpack.c.h.b16 %v643
        %v1151 = vunpack.c.l.b16 %v644
        %v1152 = vunpack.c.h.b16 %v644
        %v1153 = vunpack.c.l.b16 %v645
        %v1154 = vunpack.c.h.b16 %v645
        %v1155 = vunpack.c.l.b16 %v646
        %v1156 = vunpack.c.h.b16 %v646
        %v1157 = vunpack.c.l.b16 %v647
        %v1158 = vunpack.c.h.b16 %v647
        %v1159 = vunpack.c.l.b16 %v648
        %v1160 = vunpack.c.h.b16 %v648
        %v1161 = vunpack.c.l.b16 %v649
        %v1162 = vunpack.c.h.b16 %v649
        %v1163 = vunpack.c.l.b16 %v650
        %v1164 = vunpack.c.h.b16 %v650
        %v1165 = vunpack.c.l.b16 %v651
        %v1166 = vunpack.c.h.b16 %v651
        %v1167 = vunpack.c.l.b16 %v652
        %v1168 = vunpack.c.h.b16 %v652
        %v1169 = vunpack.c.l.b16 %v653
        %v1170 = vunpack.c.h.b16 %v653
        %v1171 = vunpack.c.l.b16 %v654
        %v1172 = vunpack.c.h.b16 %v654
        %v1173 = vunpack.c.l.b16 %v655
        %v1174 = vunpack.c.h.b16 %v655
        %v1175 = vunpack.c.l.b16 %v656
        %v1176 = vunpack.c.h.b16 %v656
        %v1177 = vunpack.c.l.b16 %v657
        %v1178 = vunpack.c.h.b16 %v657
        %v1179 = vunpack.c.l.b16 %v658
        %v1180 = vunpack.c.h.b16 %v658
        %v1181 = vunpack.c.l.b16 %v659
        %v1182 = vunpack.c.h.b16 %v659
        %v1183 = vunpack.c.l.b16 %v660
        %v1184 = vunpack.c.h.b16 %v660
        %v1185 = vunpack.c.l.b16 %v661
        %v1186 = vunpack.c.h.b16 %v661
        %v1187 = vunpack.c.l.b16 %v662
        %v1188 = vunpack.c.h.b16 %v662
        %v1189 = vunpack.c.l.b16 %v663
        %v1190 = vunpack.c.h.b16 %v663
        %v1191 = vunpack.c.l.b16 %v664
        %v1192 = vunpack.c.h.b16 %v664
        %v1193 = vunpack.c.l.b16 %v665
        %v1194 = vunpack.c.h.b16 %v665
        %v1195 = vunpack.c.l.b16 %v666
        %v1196 = vunpack.c.h.b16 %v666
        %v1197 = vunpack.c.l.b16 %v667
        %v1198 = vunpack.c.h.b16 %v667
        %v1199 = vunpack.c.l.b16 %v668
        %v1200 = vunpack.c.h.b16 %v668
        %v1201 = vunpack.c.l.b16 %v669
        %v1202 = vunpack.c.h.b16 %v669
        %v1203 = vunpack.c.l.b16 %v670
        %v1204 = vunpack.c.h.b16 %v670
        %v1205 = vunpack.c.l.b16 %v671
        %v1206 = vunpack.c.h.b16 %v671
        %v1207 = vunpack.c.l.b16 %v672
        %v1208 = vunpack.c.h.b16 %v672
        %v1209 = vunpack.c.l.b16 %v673
        %v1210 = vunpack.c.h.b16 %v673
        %v1211 = vunpack.c.l.b16 %v674
        %v1212 = vunpack.c.h.b16 %v674
        %v1213 = vunpack.c.l.b16 %v675
        %v1214 = vunpack.c.h.b16 %v675
        %v1215 = vunpack.c.l.b16 %v676
        %v1216 = vunpack.c.h.b16 %v676
        %v1217 = vunpack.c.l.b16 %v677
        %v1218 = vunpack.c.h.b16 %v677
        %v1219 = vunpack.c.l.b16 %v678
        %v1220 = vunpack.c.h.b16 %v678
        %v1221 = vunpack.c.l.b16 %v679
        %v1222 = vunpack.c.h.b16 %v679
        %v1223 = vunpack.c.l.b16 %v680
        %v1224 = vunpack.c.h.b16 %v680
        %v1225 = vpack.c.b16 %v973, %v969
        %v1226 = vpack.c.b16 %v974, %v970
        %v1227 = vpack.c.b16 %v975, %v971
        %v1228 = vpack.c.b16 %v976, %v972
        %v1229 = vpack.c.b16 %v981, %v977
        %v1230 = vpack.c.b16 %v982, %v978
        %v1231 = vpack.c.b16 %v983, %v979
        %v1232 = vpack.c.b16 %v984, %v980
        %v1233 = vpack.c.b16 %v989, %v985
        %v1234 = vpack.c.b16 %v990, %v986
        %v1235 = vpack.c.b16 %v991, %v987
        %v1236 = vpack.c.b16 %v992, %v988
        %v1237 = vpack.c.b16 %v997, %v993
        %v1238 = vpack.c.b16 %v998, %v994
        %v1239 = vpack.c.b16 %v999, %v995
        %v1240 = vpack.c.b16 %v1000, %v996
        %v1241 = vpack.c.b16 %v1005, %v1001
        %v1242 = vpack.c.b16 %v1006, %v1002
        %v1243 = vpack.c.b16 %v1007, %v1003
        %v1244 = vpack.c.b16 %v1008, %v1004
        %v1245 = vpack.c.b16 %v1013, %v1009
        %v1246 = vpack.c.b16 %v1014, %v1010
        %v1247 = vpack.c.b16 %v1015, %v1011
        %v1248 = vpack.c.b16 %v1016, %v1012
        %v1249 = vpack.c.b16 %v1021, %v1017
        %v1250 = vpack.c.b16 %v1022, %v1018
        %v1251 = vpack.c.b16 %v1023, %v1019
        %v1252 = vpack.c.b16 %v1024, %v1020
        %v1253 = vpack.c.b16 %v1029, %v1025
        %v1254 = vpack.c.b16 %v1030, %v1026
        %v1255 = vpack.c.b16 %v1031, %v1027
        %v1256 = vpack.c.b16 %v1032, %v1028
        %v1257 = vpack.c.b16 %v1037, %v1033
        %v1258 = vpack.c.b16 %v1038, %v1034
        %v1259 = vpack.c.b16 %v1039, %v1035
        %v1260 = vpack.c.b16 %v1040, %v1036
        %v1261 = vpack.c.b16 %v1045, %v1041
        %v1262 = vpack.c.b16 %v1046, %v1042
        %v1263 = vpack.c.b16 %v1047, %v1043
        %v1264 = vpack.c.b16 %v1048, %v1044
        %v1265 = vpack.c.b16 %v1053, %v1049
        %v1266 = vpack.c.b16 %v1054, %v1050
        %v1267 = vpack.c.b16 %v1055, %v1051
        %v1268 = vpack.c.b16 %v1056, %v1052
        %v1269 = vpack.c.b16 %v1061, %v1057
        %v1270 = vpack.c.b16 %v1062, %v1058
        %v1271 = vpack.c.b16 %v1063, %v1059
        %v1272 = vpack.c.b16 %v1064, %v1060
        %v1273 = vpack.c.b16 %v1069, %v1065
        %v1274 = vpack.c.b16 %v1070, %v1066
        %v1275 = vpack.c.b16 %v1071, %v1067
        %v1276 = vpack.c.b16 %v1072, %v1068
        %v1277 = vpack.c.b16 %v1077, %v1073
        %v1278 = vpack.c.b16 %v1078, %v1074
        %v1279 = vpack.c.b16 %v1079, %v1075
        %v1280 = vpack.c.b16 %v1080, %v1076
        %v1281 = vpack.c.b16 %v1085, %v1081
        %v1282 = vpack.c.b16 %v1086, %v1082
        %v1283 = vpack.c.b16 %v1087, %v1083
        %v1284 = vpack.c.b16 %v1088, %v1084
        %v1285 = vpack.c.b16 %v1093, %v1089
        %v1286 = vpack.c.b16 %v1094, %v1090
        %v1287 = vpack.c.b16 %v1095, %v1091
        %v1288 = vpack.c.b16 %v1096, %v1092
        %v1289 = vpack.c.b16 %v1101, %v1097
        %v1290 = vpack.c.b16 %v1102, %v1098
        %v1291 = vpack.c.b16 %v1103, %v1099
        %v1292 = vpack.c.b16 %v1104, %v1100
        %v1293 = vpack.c.b16 %v1109, %v1105
        %v1294 = vpack.c.b16 %v1110, %v1106
        %v1295 = vpack.c.b16 %v1111, %v1107
        %v1296 = vpack.c.b16 %v1112, %v1108
        %v1297 = vpack.c.b16 %v1117, %v1113
        %v1298 = vpack.c.b16 %v1118, %v1114
        %v1299 = vpack.c.b16 %v1119, %v1115
        %v1300 = vpack.c.b16 %v1120, %v1116
        %v1301 = vpack.c.b16 %v1125, %v1121
        %v1302 = vpack.c.b16 %v1126, %v1122
        %v1303 = vpack.c.b16 %v1127, %v1123
        %v1304 = vpack.c.b16 %v1128, %v1124
        %v1305 = vpack.c.b16 %v1133, %v1129
        %v1306 = vpack.c.b16 %v1134, %v1130
        %v1307 = vpack.c.b16 %v1135, %v1131
        %v1308 = vpack.c.b16 %v1136, %v1132
        %v1309 = vpack.c.b16 %v1141, %v1137
        %v1310 = vpack.c.b16 %v1142, %v1138
        %v1311 = vpack.c.b16 %v1143, %v1139
        %v1312 = vpack.c.b16 %v1144, %v1140
        %v1313 = vpack.c.b16 %v1149, %v1145
        %v1314 = vpack.c.b16 %v1150, %v1146
        %v1315 = vpack.c.b16 %v1151, %v1147
        %v1316 = vpack.c.b16 %v1152, %v1148
        %v1317 = vpack.c.b16 %v1157, %v1153
        %v1318 = vpack.c.b16 %v1158, %v1154
        %v1319 = vpack.c.b16 %v1159, %v1155
        %v1320 = vpack.c.b16 %v1160, %v1156
        %v1321 = vpack.c.b16 %v1165, %v1161
        %v1322 = vpack.c.b16 %v1166, %v1162
        %v1323 = vpack.c.b16 %v1167, %v1163
        %v1324 = vpack.c.b16 %v1168, %v1164
        %v1325 = vpack.c.b16 %v1173, %v1169
        %v1326 = vpack.c.b16 %v1174, %v1170
        %v1327 = vpack.c.b16 %v1175, %v1171
        %v1328 = vpack.c.b16 %v1176, %v1172
        %v1329 = vpack.c.b16 %v1181, %v1177
        %v1330 = vpack.c.b16 %v1182, %v1178
        %v1331 = vpack.c.b16 %v1183, %v1179
        %v1332 = vpack.c.b16 %v1184, %v1180
        %v1333 = vpack.c.b16 %v1189, %v1185
        %v1334 = vpack.c.b16 %v1190, %v1186
        %v1335 = vpack.c.b16 %v1191, %v1187
        %v1336 = vpack.c.b16 %v1192, %v1188
        %v1337 = vpack.c.b16 %v1197, %v1193
        %v1338 = vpack.c.b16 %v1198, %v1194
        %v1339 = vpack.c.b16 %v1199, %v1195
        %v1340 = vpack.c.b16 %v1200, %v1196
        %v1341 = vpack.c.b16 %v1205, %v1201
        %v1342 = vpack.c.b16 %v1206, %v1202
        %v1343 = vpack.c.b16 %v1207, %v1203
        %v1344 = vpack.c.b16 %v1208, %v1204
        %v1345 = vpack.c.b16 %v1213, %v1209
        %v1346 = vpack.c.b16 %v1214, %v1210
        %v1347 = vpack.c.b16 %v1215, %v1211
        %v1348 = vpack.c.b16 %v1216, %v1212
        %v1349 = vpack.c.b16 %v1221, %v1217
        %v1350 = vpack.c.b16 %v1222, %v1218
        %v1351 = vpack.c.b16 %v1223, %v1219
        %v1352 = vpack.c.b16 %v1224, %v1220
        %1481 = vmatprep.subr.bf16.mxu0 %v1226
        %1482 = vmatpush1.bf16.msra.mxu0 %v1225
        %1483 = vmatprep.subr.bf16.mxu0 %v1230
        %1484 = vmatpush1.bf16.msra.mxu0 %v1229
        %1485 = vmatprep.subr.bf16.mxu0 %v1234
        %1486 = vmatpush1.bf16.msra.mxu0 %v1233
        %1487 = vmatprep.subr.bf16.mxu0 %v1238
        %1488 = vmatpush1.bf16.msra.mxu0 %v1237
        %1489 = vmatprep.subr.bf16.mxu0 %v1242
        %1490 = vmatpush1.bf16.msra.mxu0 %v1241
        %1491 = vmatprep.subr.bf16.mxu0 %v1246
        %1492 = vmatpush1.bf16.msra.mxu0 %v1245
        %1493 = vmatprep.subr.bf16.mxu0 %v1250
        %1494 = vmatpush1.bf16.msra.mxu0 %v1249
        %1495 = vmatprep.subr.bf16.mxu0 %v1254
        %1496 = vmatpush1.bf16.msra.mxu0 %v1253
        %1497 = vmatprep.subr.bf16.mxu0 %v1258
        %1498 = vmatpush1.bf16.msra.mxu0 %v1257
        %1499 = vmatprep.subr.bf16.mxu0 %v1262
        %1500 = vmatpush1.bf16.msra.mxu0 %v1261
        %1501 = vmatprep.subr.bf16.mxu0 %v1266
        %1502 = vmatpush1.bf16.msra.mxu0 %v1265
        %1503 = vmatprep.subr.bf16.mxu0 %v1270
        %1504 = vmatpush1.bf16.msra.mxu0 %v1269
        %1505 = vmatprep.subr.bf16.mxu0 %v1274
        %1506 = vmatpush1.bf16.msra.mxu0 %v1273
        %1507 = vmatprep.subr.bf16.mxu0 %v1278
        %1508 = vmatpush1.bf16.msra.mxu0 %v1277
        %1509 = vmatprep.subr.bf16.mxu0 %v1282
        %1510 = vmatpush1.bf16.msra.mxu0 %v1281
        %1511 = vmatprep.subr.bf16.mxu0 %v1286
        %1512 = vmatpush1.bf16.msra.mxu0 %v1285
        %1513 = vmatprep.mubr.bf16.mxu0 %v778
        %1514 = vmatmul.mubr.bf16.gmra.mrb[0].mxu0 %v777
        %v1515 = vpop.f32.mrb[0].mxu0
        %v1516 = vadd.f32 0.0, %v1515
        %v1517 = vpop.f32.mrb[0].mxu0
        %v1518 = vadd.f32 0.0, %v1517
        %v1519 = vpop.f32.mrb[0].mxu0
        %v1520 = vadd.f32 0.0, %v1519
        %v1521 = vpop.f32.mrb[0].mxu0
        %v1522 = vadd.f32 0.0, %v1521
        %1523 = vmatprep.mubr.bf16.mxu0 %v782
        %1524 = vmatmul.mubr.bf16.gmra.mrb[0].mxu0 %v781
        %v1525 = vpop.f32.mrb[0].mxu0
        %v1526 = vadd.f32 0.0, %v1525
        %v1527 = vpop.f32.mrb[0].mxu0
        %v1528 = vadd.f32 0.0, %v1527
        %v1529 = vpop.f32.mrb[0].mxu0
        %v1530 = vadd.f32 0.0, %v1529
        %v1531 = vpop.f32.mrb[0].mxu0
        %v1532 = vadd.f32 0.0, %v1531
        %1533 = vmatprep.mubr.bf16.mxu0 %v786
        %1534 = vmatmul.mubr.bf16.gmra.mrb[0].mxu0 %v785
        %v1535 = vpop.f32.mrb[0].mxu0
        %v1536 = vadd.f32 0.0, %v1535
        %v1537 = vpop.f32.mrb[0].mxu0
        %v1538 = vadd.f32 0.0, %v1537
        %v1539 = vpop.f32.mrb[0].mxu0
        %v1540 = vadd.f32 0.0, %v1539
        %v1541 = vpop.f32.mrb[0].mxu0
        %v1542 = vadd.f32 0.0, %v1541
        %1543 = vmatprep.mubr.bf16.mxu0 %v790
        %1544 = vmatmul.mubr.bf16.gmra.mrb[0].mxu0 %v789
        %v1545 = vpop.f32.mrb[0].mxu0
        %v1546 = vadd.f32 0.0, %v1545
        %v1547 = vpop.f32.mrb[0].mxu0
        %v1548 = vadd.f32 0.0, %v1547
        %v1549 = vpop.f32.mrb[0].mxu0
        %v1550 = vadd.f32 0.0, %v1549
        %v1551 = vpop.f32.mrb[0].mxu0
        %v1552 = vadd.f32 0.0, %v1551
        %1553 = vmatprep.mubr.bf16.mxu0 %v794
        %1554 = vmatmul.mubr.bf16.gmra.mrb[0].mxu0 %v793
        %v1555 = vpop.f32.mrb[0].mxu0
        %v1556 = vadd.f32 0.0, %v1555
        %v1557 = vpop.f32.mrb[0].mxu0
        %v1558 = vadd.f32 0.0, %v1557
        %v1559 = vpop.f32.mrb[0].mxu0
        %v1560 = vadd.f32 0.0, %v1559
        %v1561 = vpop.f32.mrb[0].mxu0
        %v1562 = vadd.f32 0.0, %v1561
        %1563 = vmatprep.mubr.bf16.mxu0 %v798
        %1564 = vmatmul.mubr.bf16.gmra.mrb[0].mxu0 %v797
        %v1565 = vpop.f32.mrb[0].mxu0
        %v1566 = vadd.f32 0.0, %v1565
        %v1567 = vpop.f32.mrb[0].mxu0
        %v1568 = vadd.f32 0.0, %v1567
        %v1569 = vpop.f32.mrb[0].mxu0
        %v1570 = vadd.f32 0.0, %v1569
        %v1571 = vpop.f32.mrb[0].mxu0
        %v1572 = vadd.f32 0.0, %v1571
        %1573 = vmatprep.mubr.bf16.mxu0 %v802
        %1574 = vmatmul.mubr.bf16.gmra.mrb[0].mxu0 %v801
        %v1575 = vpop.f32.mrb[0].mxu0
        %v1576 = vadd.f32 0.0, %v1575
        %v1577 = vpop.f32.mrb[0].mxu0
        %v1578 = vadd.f32 0.0, %v1577
        %v1579 = vpop.f32.mrb[0].mxu0
        %v1580 = vadd.f32 0.0, %v1579
        %v1581 = vpop.f32.mrb[0].mxu0
        %v1582 = vadd.f32 0.0, %v1581
        %1583 = vmatprep.mubr.bf16.mxu0 %v806
        %1584 = vmatmul.mubr.bf16.gmra.mrb[0].mxu0 %v805
        %v1585 = vpop.f32.mrb[0].mxu0
        %v1586 = vadd.f32 0.0, %v1585
        %v1587 = vpop.f32.mrb[0].mxu0
        %v1588 = vadd.f32 0.0, %v1587
        %v1589 = vpop.f32.mrb[0].mxu0
        %v1590 = vadd.f32 0.0, %v1589
        %v1591 = vpop.f32.mrb[0].mxu0
        %v1592 = vadd.f32 0.0, %v1591
        %1593 = vdwg.mxu0
        %1594 = vmatprep.subr.bf16.mxu0 %v1290
        %1595 = vmatpush1.bf16.msra.mxu0 %v1289
        %1596 = vmatprep.subr.bf16.mxu0 %v1294
        %1597 = vmatpush1.bf16.msra.mxu0 %v1293
        %1598 = vmatprep.subr.bf16.mxu0 %v1298
        %1599 = vmatpush1.bf16.msra.mxu0 %v1297
        %1600 = vmatprep.subr.bf16.mxu0 %v1302
        %1601 = vmatpush1.bf16.msra.mxu0 %v1301
        %1602 = vmatprep.subr.bf16.mxu0 %v1306
        %1603 = vmatpush1.bf16.msra.mxu0 %v1305
        %1604 = vmatprep.subr.bf16.mxu0 %v1310
        %1605 = vmatpush1.bf16.msra.mxu0 %v1309
        %1606 = vmatprep.subr.bf16.mxu0 %v1314
        %1607 = vmatpush1.bf16.msra.mxu0 %v1313
        %1608 = vmatprep.subr.bf16.mxu0 %v1318
        %1609 = vmatpush1.bf16.msra.mxu0 %v1317
        %1610 = vmatprep.subr.bf16.mxu0 %v1322
        %1611 = vmatpush1.bf16.msra.mxu0 %v1321
        %1612 = vmatprep.subr.bf16.mxu0 %v1326
        %1613 = vmatpush1.bf16.msra.mxu0 %v1325
        %1614 = vmatprep.subr.bf16.mxu0 %v1330
        %1615 = vmatpush1.bf16.msra.mxu0 %v1329
        %1616 = vmatprep.subr.bf16.mxu0 %v1334
        %1617 = vmatpush1.bf16.msra.mxu0 %v1333
        %1618 = vmatprep.subr.bf16.mxu0 %v1338
        %1619 = vmatpush1.bf16.msra.mxu0 %v1337
        %1620 = vmatprep.subr.bf16.mxu0 %v1342
        %1621 = vmatpush1.bf16.msra.mxu0 %v1341
        %1622 = vmatprep.subr.bf16.mxu0 %v1346
        %1623 = vmatpush1.bf16.msra.mxu0 %v1345
        %1624 = vmatprep.subr.bf16.mxu0 %v1350
        %1625 = vmatpush1.bf16.msra.mxu0 %v1349
        %1626 = vmatprep.mubr.bf16.mxu0 %v780
        %1627 = vmatmul.mubr.bf16.gmra.mrb[0].mxu0 %v779
        %v1628 = vpop.f32.mrb[0].mxu0
        %v1629 = vadd.f32 %v1516, %v1628
        %v1630 = vpop.f32.mrb[0].mxu0
        %v1631 = vadd.f32 %v1518, %v1630
        %v1632 = vpop.f32.mrb[0].mxu0
        %v1633 = vadd.f32 %v1520, %v1632
        %v1634 = vpop.f32.mrb[0].mxu0
        %v1635 = vadd.f32 %v1522, %v1634
        %1636 = vmatprep.mubr.bf16.mxu0 %v784
        %1637 = vmatmul.mubr.bf16.gmra.mrb[0].mxu0 %v783
        %v1638 = vpop.f32.mrb[0].mxu0
        %v1639 = vadd.f32 %v1526, %v1638
        %v1640 = vpop.f32.mrb[0].mxu0
        %v1641 = vadd.f32 %v1528, %v1640
        %v1642 = vpop.f32.mrb[0].mxu0
        %v1643 = vadd.f32 %v1530, %v1642
        %v1644 = vpop.f32.mrb[0].mxu0
        %v1645 = vadd.f32 %v1532, %v1644
        %1646 = vmatprep.mubr.bf16.mxu0 %v788
        %1647 = vmatmul.mubr.bf16.gmra.mrb[0].mxu0 %v787
        %v1648 = vpop.f32.mrb[0].mxu0
        %v1649 = vadd.f32 %v1536, %v1648
        %v1650 = vpop.f32.mrb[0].mxu0
        %v1651 = vadd.f32 %v1538, %v1650
        %v1652 = vpop.f32.mrb[0].mxu0
        %v1653 = vadd.f32 %v1540, %v1652
        %v1654 = vpop.f32.mrb[0].mxu0
        %v1655 = vadd.f32 %v1542, %v1654
        %1656 = vmatprep.mubr.bf16.mxu0 %v792
        %1657 = vmatmul.mubr.bf16.gmra.mrb[0].mxu0 %v791
        %v1658 = vpop.f32.mrb[0].mxu0
        %v1659 = vadd.f32 %v1546, %v1658
        %v1660 = vpop.f32.mrb[0].mxu0
        %v1661 = vadd.f32 %v1548, %v1660
        %v1662 = vpop.f32.mrb[0].mxu0
        %v1663 = vadd.f32 %v1550, %v1662
        %v1664 = vpop.f32.mrb[0].mxu0
        %v1665 = vadd.f32 %v1552, %v1664
        %1666 = vmatprep.mubr.bf16.mxu0 %v796
        %1667 = vmatmul.mubr.bf16.gmra.mrb[0].mxu0 %v795
        %v1668 = vpop.f32.mrb[0].mxu0
        %v1669 = vadd.f32 %v1556, %v1668
        %v1670 = vpop.f32.mrb[0].mxu0
        %v1671 = vadd.f32 %v1558, %v1670
        %v1672 = vpop.f32.mrb[0].mxu0
        %v1673 = vadd.f32 %v1560, %v1672
        %v1674 = vpop.f32.mrb[0].mxu0
        %v1675 = vadd.f32 %v1562, %v1674
        %1676 = vmatprep.mubr.bf16.mxu0 %v800
        %1677 = vmatmul.mubr.bf16.gmra.mrb[0].mxu0 %v799
        %v1678 = vpop.f32.mrb[0].mxu0
        %v1679 = vadd.f32 %v1566, %v1678
        %v1680 = vpop.f32.mrb[0].mxu0
        %v1681 = vadd.f32 %v1568, %v1680
        %v1682 = vpop.f32.mrb[0].mxu0
        %v1683 = vadd.f32 %v1570, %v1682
        %v1684 = vpop.f32.mrb[0].mxu0
        %v1685 = vadd.f32 %v1572, %v1684
        %1686 = vmatprep.mubr.bf16.mxu0 %v804
        %1687 = vmatmul.mubr.bf16.gmra.mrb[0].mxu0 %v803
        %v1688 = vpop.f32.mrb[0].mxu0
        %v1689 = vadd.f32 %v1576, %v1688
        %v1690 = vpop.f32.mrb[0].mxu0
        %v1691 = vadd.f32 %v1578, %v1690
        %v1692 = vpop.f32.mrb[0].mxu0
        %v1693 = vadd.f32 %v1580, %v1692
        %v1694 = vpop.f32.mrb[0].mxu0
        %v1695 = vadd.f32 %v1582, %v1694
        %1696 = vmatprep.mubr.bf16.mxu0 %v808
        %1697 = vmatmul.mubr.bf16.gmra.mrb[0].mxu0 %v807
        %v1698 = vpop.f32.mrb[0].mxu0
        %v1699 = vadd.f32 %v1586, %v1698
        %v1700 = vpop.f32.mrb[0].mxu0
        %v1701 = vadd.f32 %v1588, %v1700
        %v1702 = vpop.f32.mrb[0].mxu0
        %v1703 = vadd.f32 %v1590, %v1702
        %v1704 = vpop.f32.mrb[0].mxu0
        %v1705 = vadd.f32 %v1592, %v1704
        %1706 = vdwg.mxu0
        %1707 = vmatprep.subr.bf16.mxu0 %v1228
        %1708 = vmatpush1.bf16.msra.mxu0 %v1227
        %1709 = vmatprep.subr.bf16.mxu0 %v1232
        %1710 = vmatpush1.bf16.msra.mxu0 %v1231
        %1711 = vmatprep.subr.bf16.mxu0 %v1236
        %1712 = vmatpush1.bf16.msra.mxu0 %v1235
        %1713 = vmatprep.subr.bf16.mxu0 %v1240
        %1714 = vmatpush1.bf16.msra.mxu0 %v1239
        %1715 = vmatprep.subr.bf16.mxu0 %v1244
        %1716 = vmatpush1.bf16.msra.mxu0 %v1243
        %1717 = vmatprep.subr.bf16.mxu0 %v1248
        %1718 = vmatpush1.bf16.msra.mxu0 %v1247
        %1719 = vmatprep.subr.bf16.mxu0 %v1252
        %1720 = vmatpush1.bf16.msra.mxu0 %v1251
        %1721 = vmatprep.subr.bf16.mxu0 %v1256
        %1722 = vmatpush1.bf16.msra.mxu0 %v1255
        %1723 = vmatprep.subr.bf16.mxu0 %v1260
        %1724 = vmatpush1.bf16.msra.mxu0 %v1259
        %1725 = vmatprep.subr.bf16.mxu0 %v1264
        %1726 = vmatpush1.bf16.msra.mxu0 %v1263
        %1727 = vmatprep.subr.bf16.mxu0 %v1268
        %1728 = vmatpush1.bf16.msra.mxu0 %v1267
        %1729 = vmatprep.subr.bf16.mxu0 %v1272
        %1730 = vmatpush1.bf16.msra.mxu0 %v1271
        %1731 = vmatprep.subr.bf16.mxu0 %v1276
        %1732 = vmatpush1.bf16.msra.mxu0 %v1275
        %1733 = vmatprep.subr.bf16.mxu0 %v1280
        %1734 = vmatpush1.bf16.msra.mxu0 %v1279
        %1735 = vmatprep.subr.bf16.mxu0 %v1284
        %1736 = vmatpush1.bf16.msra.mxu0 %v1283
        %1737 = vmatprep.subr.bf16.mxu0 %v1288
        %1738 = vmatpush1.bf16.msra.mxu0 %v1287
        %1739 = vmatprep.mubr.bf16.mxu0 %v778
        %1740 = vmatmul.mubr.bf16.gmra.mrb[0].mxu0 %v777
        %v1741 = vpop.f32.mrb[0].mxu0
        %v1742 = vadd.f32 0.0, %v1741
        %v1743 = vpop.f32.mrb[0].mxu0
        %v1744 = vadd.f32 0.0, %v1743
        %v1745 = vpop.f32.mrb[0].mxu0
        %v1746 = vadd.f32 0.0, %v1745
        %v1747 = vpop.f32.mrb[0].mxu0
        %v1748 = vadd.f32 0.0, %v1747
        %1749 = vmatprep.mubr.bf16.mxu0 %v782
        %1750 = vmatmul.mubr.bf16.gmra.mrb[0].mxu0 %v781
        %v1751 = vpop.f32.mrb[0].mxu0
        %v1752 = vadd.f32 0.0, %v1751
        %v1753 = vpop.f32.mrb[0].mxu0
        %v1754 = vadd.f32 0.0, %v1753
        %v1755 = vpop.f32.mrb[0].mxu0
        %v1756 = vadd.f32 0.0, %v1755
        %v1757 = vpop.f32.mrb[0].mxu0
        %v1758 = vadd.f32 0.0, %v1757
        %1759 = vmatprep.mubr.bf16.mxu0 %v786
        %1760 = vmatmul.mubr.bf16.gmra.mrb[0].mxu0 %v785
        %v1761 = vpop.f32.mrb[0].mxu0
        %v1762 = vadd.f32 0.0, %v1761
        %v1763 = vpop.f32.mrb[0].mxu0
        %v1764 = vadd.f32 0.0, %v1763
        %v1765 = vpop.f32.mrb[0].mxu0
        %v1766 = vadd.f32 0.0, %v1765
        %v1767 = vpop.f32.mrb[0].mxu0
        %v1768 = vadd.f32 0.0, %v1767
        %1769 = vmatprep.mubr.bf16.mxu0 %v790
        %1770 = vmatmul.mubr.bf16.gmra.mrb[0].mxu0 %v789
        %v1771 = vpop.f32.mrb[0].mxu0
        %v1772 = vadd.f32 0.0, %v1771
        %v1773 = vpop.f32.mrb[0].mxu0
        %v1774 = vadd.f32 0.0, %v1773
        %v1775 = vpop.f32.mrb[0].mxu0
        %v1776 = vadd.f32 0.0, %v1775
        %v1777 = vpop.f32.mrb[0].mxu0
        %v1778 = vadd.f32 0.0, %v1777
        %1779 = vmatprep.mubr.bf16.mxu0 %v794
        %1780 = vmatmul.mubr.bf16.gmra.mrb[0].mxu0 %v793
        %v1781 = vpop.f32.mrb[0].mxu0
        %v1782 = vadd.f32 0.0, %v1781
        %v1783 = vpop.f32.mrb[0].mxu0
        %v1784 = vadd.f32 0.0, %v1783
        %v1785 = vpop.f32.mrb[0].mxu0
        %v1786 = vadd.f32 0.0, %v1785
        %v1787 = vpop.f32.mrb[0].mxu0
        %v1788 = vadd.f32 0.0, %v1787
        %1789 = vmatprep.mubr.bf16.mxu0 %v798
        %1790 = vmatmul.mubr.bf16.gmra.mrb[0].mxu0 %v797
        %v1791 = vpop.f32.mrb[0].mxu0
        %v1792 = vadd.f32 0.0, %v1791
        %v1793 = vpop.f32.mrb[0].mxu0
        %v1794 = vadd.f32 0.0, %v1793
        %v1795 = vpop.f32.mrb[0].mxu0
        %v1796 = vadd.f32 0.0, %v1795
        %v1797 = vpop.f32.mrb[0].mxu0
        %v1798 = vadd.f32 0.0, %v1797
        %1799 = vmatprep.mubr.bf16.mxu0 %v802
        %1800 = vmatmul.mubr.bf16.gmra.mrb[0].mxu0 %v801
        %v1801 = vpop.f32.mrb[0].mxu0
        %v1802 = vadd.f32 0.0, %v1801
        %v1803 = vpop.f32.mrb[0].mxu0
        %v1804 = vadd.f32 0.0, %v1803
        %v1805 = vpop.f32.mrb[0].mxu0
        %v1806 = vadd.f32 0.0, %v1805
        %v1807 = vpop.f32.mrb[0].mxu0
        %v1808 = vadd.f32 0.0, %v1807
        %1809 = vmatprep.mubr.bf16.mxu0 %v806
        %1810 = vmatmul.mubr.bf16.gmra.mrb[0].mxu0 %v805
        %v1811 = vpop.f32.mrb[0].mxu0
        %v1812 = vadd.f32 0.0, %v1811
        %v1813 = vpop.f32.mrb[0].mxu0
        %v1814 = vadd.f32 0.0, %v1813
        %v1815 = vpop.f32.mrb[0].mxu0
        %v1816 = vadd.f32 0.0, %v1815
        %v1817 = vpop.f32.mrb[0].mxu0
        %v1818 = vadd.f32 0.0, %v1817
        %1819 = vdwg.mxu0
        %1820 = vmatprep.subr.bf16.mxu0 %v1292
        %1821 = vmatpush1.bf16.msra.mxu0 %v1291
        %1822 = vmatprep.subr.bf16.mxu0 %v1296
        %1823 = vmatpush1.bf16.msra.mxu0 %v1295
        %1824 = vmatprep.subr.bf16.mxu0 %v1300
        %1825 = vmatpush1.bf16.msra.mxu0 %v1299
        %1826 = vmatprep.subr.bf16.mxu0 %v1304
        %1827 = vmatpush1.bf16.msra.mxu0 %v1303
        %1828 = vmatprep.subr.bf16.mxu0 %v1308
        %1829 = vmatpush1.bf16.msra.mxu0 %v1307
        %1830 = vmatprep.subr.bf16.mxu0 %v1312
        %1831 = vmatpush1.bf16.msra.mxu0 %v1311
        %1832 = vmatprep.subr.bf16.mxu0 %v1316
        %1833 = vmatpush1.bf16.msra.mxu0 %v1315
        %1834 = vmatprep.subr.bf16.mxu0 %v1320
        %1835 = vmatpush1.bf16.msra.mxu0 %v1319
        %1836 = vmatprep.subr.bf16.mxu0 %v1324
        %1837 = vmatpush1.bf16.msra.mxu0 %v1323
        %1838 = vmatprep.subr.bf16.mxu0 %v1328
        %1839 = vmatpush1.bf16.msra.mxu0 %v1327
        %1840 = vmatprep.subr.bf16.mxu0 %v1332
        %1841 = vmatpush1.bf16.msra.mxu0 %v1331
        %1842 = vmatprep.subr.bf16.mxu0 %v1336
        %1843 = vmatpush1.bf16.msra.mxu0 %v1335
        %1844 = vmatprep.subr.bf16.mxu0 %v1340
        %1845 = vmatpush1.bf16.msra.mxu0 %v1339
        %1846 = vmatprep.subr.bf16.mxu0 %v1344
        %1847 = vmatpush1.bf16.msra.mxu0 %v1343
        %1848 = vmatprep.subr.bf16.mxu0 %v1348
        %1849 = vmatpush1.bf16.msra.mxu0 %v1347
        %1850 = vmatprep.subr.bf16.mxu0 %v1352
        %1851 = vmatpush1.bf16.msra.mxu0 %v1351
        %1852 = vmatprep.mubr.bf16.mxu0 %v780
        %1853 = vmatmul.mubr.bf16.gmra.mrb[0].mxu0 %v779
        %v1854 = vpop.f32.mrb[0].mxu0
        %v1855 = vadd.f32 %v1742, %v1854
        %v1856 = vpop.f32.mrb[0].mxu0
        %v1857 = vadd.f32 %v1744, %v1856
        %v1858 = vpop.f32.mrb[0].mxu0
        %v1859 = vadd.f32 %v1746, %v1858
        %v1860 = vpop.f32.mrb[0].mxu0
        %v1861 = vadd.f32 %v1748, %v1860
        %1862 = vmatprep.mubr.bf16.mxu0 %v784
        %1863 = vmatmul.mubr.bf16.gmra.mrb[0].mxu0 %v783
        %v1864 = vpop.f32.mrb[0].mxu0
        %v1865 = vadd.f32 %v1752, %v1864
        %v1866 = vpop.f32.mrb[0].mxu0
        %v1867 = vadd.f32 %v1754, %v1866
        %v1868 = vpop.f32.mrb[0].mxu0
        %v1869 = vadd.f32 %v1756, %v1868
        %v1870 = vpop.f32.mrb[0].mxu0
        %v1871 = vadd.f32 %v1758, %v1870
        %1872 = vmatprep.mubr.bf16.mxu0 %v788
        %1873 = vmatmul.mubr.bf16.gmra.mrb[0].mxu0 %v787
        %v1874 = vpop.f32.mrb[0].mxu0
        %v1875 = vadd.f32 %v1762, %v1874
        %v1876 = vpop.f32.mrb[0].mxu0
        %v1877 = vadd.f32 %v1764, %v1876
        %v1878 = vpop.f32.mrb[0].mxu0
        %v1879 = vadd.f32 %v1766, %v1878
        %v1880 = vpop.f32.mrb[0].mxu0
        %v1881 = vadd.f32 %v1768, %v1880
        %1882 = vmatprep.mubr.bf16.mxu0 %v792
        %1883 = vmatmul.mubr.bf16.gmra.mrb[0].mxu0 %v791
        %v1884 = vpop.f32.mrb[0].mxu0
        %v1885 = vadd.f32 %v1772, %v1884
        %v1886 = vpop.f32.mrb[0].mxu0
        %v1887 = vadd.f32 %v1774, %v1886
        %v1888 = vpop.f32.mrb[0].mxu0
        %v1889 = vadd.f32 %v1776, %v1888
        %v1890 = vpop.f32.mrb[0].mxu0
        %v1891 = vadd.f32 %v1778, %v1890
        %1892 = vmatprep.mubr.bf16.mxu0 %v796
        %1893 = vmatmul.mubr.bf16.gmra.mrb[0].mxu0 %v795
        %v1894 = vpop.f32.mrb[0].mxu0
        %v1895 = vadd.f32 %v1782, %v1894
        %v1896 = vpop.f32.mrb[0].mxu0
        %v1897 = vadd.f32 %v1784, %v1896
        %v1898 = vpop.f32.mrb[0].mxu0
        %v1899 = vadd.f32 %v1786, %v1898
        %v1900 = vpop.f32.mrb[0].mxu0
        %v1901 = vadd.f32 %v1788, %v1900
        %1902 = vmatprep.mubr.bf16.mxu0 %v800
        %1903 = vmatmul.mubr.bf16.gmra.mrb[0].mxu0 %v799
        %v1904 = vpop.f32.mrb[0].mxu0
        %v1905 = vadd.f32 %v1792, %v1904
        %v1906 = vpop.f32.mrb[0].mxu0
        %v1907 = vadd.f32 %v1794, %v1906
        %v1908 = vpop.f32.mrb[0].mxu0
        %v1909 = vadd.f32 %v1796, %v1908
        %v1910 = vpop.f32.mrb[0].mxu0
        %v1911 = vadd.f32 %v1798, %v1910
        %1912 = vmatprep.mubr.bf16.mxu0 %v804
        %1913 = vmatmul.mubr.bf16.gmra.mrb[0].mxu0 %v803
        %v1914 = vpop.f32.mrb[0].mxu0
        %v1915 = vadd.f32 %v1802, %v1914
        %v1916 = vpop.f32.mrb[0].mxu0
        %v1917 = vadd.f32 %v1804, %v1916
        %v1918 = vpop.f32.mrb[0].mxu0
        %v1919 = vadd.f32 %v1806, %v1918
        %v1920 = vpop.f32.mrb[0].mxu0
        %v1921 = vadd.f32 %v1808, %v1920
        %1922 = vmatprep.mubr.bf16.mxu0 %v808
        %1923 = vmatmul.mubr.bf16.gmra.mrb[0].mxu0 %v807
        %v1924 = vpop.f32.mrb[0].mxu0
        %v1925 = vadd.f32 %v1812, %v1924
        %v1926 = vpop.f32.mrb[0].mxu0
        %v1927 = vadd.f32 %v1814, %v1926
        %v1928 = vpop.f32.mrb[0].mxu0
        %v1929 = vadd.f32 %v1816, %v1928
        %v1930 = vpop.f32.mrb[0].mxu0
        %v1931 = vadd.f32 %v1818, %v1930
        %1932 = vdwg.mxu0
        %v1933 = vadd.f32 %v457, %v1629
        %v1934 = vadd.f32 %v458, %v1631
        %v1935 = vadd.f32 %v459, %v1855
        %v1936 = vadd.f32 %v460, %v1857
        %v1937 = vadd.f32 %v461, %v1633
        %v1938 = vadd.f32 %v462, %v1635
        %v1939 = vadd.f32 %v463, %v1859
        %v1940 = vadd.f32 %v464, %v1861
        %v1941 = vadd.f32 %v465, %v1639
        %v1942 = vadd.f32 %v466, %v1641
        %v1943 = vadd.f32 %v467, %v1865
        %v1944 = vadd.f32 %v468, %v1867
        %v1945 = vadd.f32 %v469, %v1643
        %v1946 = vadd.f32 %v470, %v1645
        %v1947 = vadd.f32 %v471, %v1869
        %v1948 = vadd.f32 %v472, %v1871
        %v1949 = vadd.f32 %v473, %v1649
        %v1950 = vadd.f32 %v474, %v1651
        %v1951 = vadd.f32 %v475, %v1875
        %v1952 = vadd.f32 %v476, %v1877
        %v1953 = vadd.f32 %v477, %v1653
        %v1954 = vadd.f32 %v478, %v1655
        %v1955 = vadd.f32 %v479, %v1879
        %v1956 = vadd.f32 %v480, %v1881
        %v1957 = vadd.f32 %v481, %v1659
        %v1958 = vadd.f32 %v482, %v1661
        %v1959 = vadd.f32 %v483, %v1885
        %v1960 = vadd.f32 %v484, %v1887
        %v1961 = vadd.f32 %v485, %v1663
        %v1962 = vadd.f32 %v486, %v1665
        %v1963 = vadd.f32 %v487, %v1889
        %v1964 = vadd.f32 %v488, %v1891
        %v1965 = vadd.f32 %v489, %v1669
        %v1966 = vadd.f32 %v490, %v1671
        %v1967 = vadd.f32 %v491, %v1895
        %v1968 = vadd.f32 %v492, %v1897
        %v1969 = vadd.f32 %v493, %v1673
        %v1970 = vadd.f32 %v494, %v1675
        %v1971 = vadd.f32 %v495, %v1899
        %v1972 = vadd.f32 %v496, %v1901
        %v1973 = vadd.f32 %v497, %v1679
        %v1974 = vadd.f32 %v498, %v1681
        %v1975 = vadd.f32 %v499, %v1905
        %v1976 = vadd.f32 %v500, %v1907
        %v1977 = vadd.f32 %v501, %v1683
        %v1978 = vadd.f32 %v502, %v1685
        %v1979 = vadd.f32 %v503, %v1909
        %v1980 = vadd.f32 %v504, %v1911
        %v1981 = vadd.f32 %v505, %v1689
        %v1982 = vadd.f32 %v506, %v1691
        %v1983 = vadd.f32 %v507, %v1915
        %v1984 = vadd.f32 %v508, %v1917
        %v1985 = vadd.f32 %v509, %v1693
        %v1986 = vadd.f32 %v510, %v1695
        %v1987 = vadd.f32 %v511, %v1919
        %v1988 = vadd.f32 %v512, %v1921
        %v1989 = vadd.f32 %v513, %v1699
        %v1990 = vadd.f32 %v514, %v1701
        %v1991 = vadd.f32 %v515, %v1925
        %v1992 = vadd.f32 %v516, %v1927
        %v1993 = vadd.f32 %v517, %v1703
        %v1994 = vadd.f32 %v518, %v1705
        %v1995 = vadd.f32 %v519, %v1929
        %v1996 = vadd.f32 %v520, %v1931
        %1997 = vst [vmem:[#allocation2] sm:$0xff] %v1933
        %1998 = vst [vmem:[#allocation2 + $0x8] sm:$0xff] %v1934
        %1999 = vst [vmem:[#allocation2 + $0x10] sm:$0xff] %v1935
        %2000 = vst [vmem:[#allocation2 + $0x18] sm:$0xff] %v1936
        %2001 = vst [vmem:[#allocation2 + $0x20] sm:$0xff] %v1937
        %2002 = vst [vmem:[#allocation2 + $0x28] sm:$0xff] %v1938
        %2003 = vst [vmem:[#allocation2 + $0x30] sm:$0xff] %v1939
        %2004 = vst [vmem:[#allocation2 + $0x38] sm:$0xff] %v1940
        %2005 = vst [vmem:[#allocation2 + $0x40] sm:$0xff] %v1941
        %2006 = vst [vmem:[#allocation2 + $0x48] sm:$0xff] %v1942
        %2007 = vst [vmem:[#allocation2 + $0x50] sm:$0xff] %v1943
        %2008 = vst [vmem:[#allocation2 + $0x58] sm:$0xff] %v1944
        %2009 = vst [vmem:[#allocation2 + $0x60] sm:$0xff] %v1945
        %2010 = vst [vmem:[#allocation2 + $0x68] sm:$0xff] %v1946
        %2011 = vst [vmem:[#allocation2 + $0x70] sm:$0xff] %v1947
        %2012 = vst [vmem:[#allocation2 + $0x78] sm:$0xff] %v1948
        %2013 = vst [vmem:[#allocation2 + $0x80] sm:$0xff] %v1949
        %2014 = vst [vmem:[#allocation2 + $0x88] sm:$0xff] %v1950
        %2015 = vst [vmem:[#allocation2 + $0x90] sm:$0xff] %v1951
        %2016 = vst [vmem:[#allocation2 + $0x98] sm:$0xff] %v1952
        %2017 = vst [vmem:[#allocation2 + $0xa0] sm:$0xff] %v1953
        %2018 = vst [vmem:[#allocation2 + $0xa8] sm:$0xff] %v1954
        %2019 = vst [vmem:[#allocation2 + $0xb0] sm:$0xff] %v1955
        %2020 = vst [vmem:[#allocation2 + $0xb8] sm:$0xff] %v1956
        %2021 = vst [vmem:[#allocation2 + $0xc0] sm:$0xff] %v1957
        %2022 = vst [vmem:[#allocation2 + $0xc8] sm:$0xff] %v1958
        %2023 = vst [vmem:[#allocation2 + $0xd0] sm:$0xff] %v1959
        %2024 = vst [vmem:[#allocation2 + $0xd8] sm:$0xff] %v1960
        %2025 = vst [vmem:[#allocation2 + $0xe0] sm:$0xff] %v1961
        %2026 = vst [vmem:[#allocation2 + $0xe8] sm:$0xff] %v1962
        %2027 = vst [vmem:[#allocation2 + $0xf0] sm:$0xff] %v1963
        %2028 = vst [vmem:[#allocation2 + $0xf8] sm:$0xff] %v1964
        %2029 = vst [vmem:[#allocation2 + $0x100] sm:$0xff] %v1965
        %2030 = vst [vmem:[#allocation2 + $0x108] sm:$0xff] %v1966
        %2031 = vst [vmem:[#allocation2 + $0x110] sm:$0xff] %v1967
        %2032 = vst [vmem:[#allocation2 + $0x118] sm:$0xff] %v1968
        %2033 = vst [vmem:[#allocation2 + $0x120] sm:$0xff] %v1969
        %2034 = vst [vmem:[#allocation2 + $0x128] sm:$0xff] %v1970
        %2035 = vst [vmem:[#allocation2 + $0x130] sm:$0xff] %v1971
        %2036 = vst [vmem:[#allocation2 + $0x138] sm:$0xff] %v1972
        %2037 = vst [vmem:[#allocation2 + $0x140] sm:$0xff] %v1973
        %2038 = vst [vmem:[#allocation2 + $0x148] sm:$0xff] %v1974
        %2039 = vst [vmem:[#allocation2 + $0x150] sm:$0xff] %v1975
        %2040 = vst [vmem:[#allocation2 + $0x158] sm:$0xff] %v1976
        %2041 = vst [vmem:[#allocation2 + $0x160] sm:$0xff] %v1977
        %2042 = vst [vmem:[#allocation2 + $0x168] sm:$0xff] %v1978
        %2043 = vst [vmem:[#allocation2 + $0x170] sm:$0xff] %v1979
        %2044 = vst [vmem:[#allocation2 + $0x178] sm:$0xff] %v1980
        %2045 = vst [vmem:[#allocation2 + $0x180] sm:$0xff] %v1981
        %2046 = vst [vmem:[#allocation2 + $0x188] sm:$0xff] %v1982
        %2047 = vst [vmem:[#allocation2 + $0x190] sm:$0xff] %v1983
        %2048 = vst [vmem:[#allocation2 + $0x198] sm:$0xff] %v1984
        %2049 = vst [vmem:[#allocation2 + $0x1a0] sm:$0xff] %v1985
        %2050 = vst [vmem:[#allocation2 + $0x1a8] sm:$0xff] %v1986
        %2051 = vst [vmem:[#allocation2 + $0x1b0] sm:$0xff] %v1987
        %2052 = vst [vmem:[#allocation2 + $0x1b8] sm:$0xff] %v1988
        %2053 = vst [vmem:[#allocation2 + $0x1c0] sm:$0xff] %v1989
        %2054 = vst [vmem:[#allocation2 + $0x1c8] sm:$0xff] %v1990
        %2055 = vst [vmem:[#allocation2 + $0x1d0] sm:$0xff] %v1991
        %2056 = vst [vmem:[#allocation2 + $0x1d8] sm:$0xff] %v1992
        %2057 = vst [vmem:[#allocation2 + $0x1e0] sm:$0xff] %v1993
        %2058 = vst [vmem:[#allocation2 + $0x1e8] sm:$0xff] %v1994
        %2059 = vst [vmem:[#allocation2 + $0x1f0] sm:$0xff] %v1995
        %2060 = vst [vmem:[#allocation2 + $0x1f8] sm:$0xff] %v1996
        %p2061 = scmp.eq.s32.totalorder %s34, 3
        // Predicated region
        $region61: #{tpu_custom_call.1} parent=35 // pred_check
          %p2062 = pneg %p2061
        $region62: #{tpu_custom_call.1} parent=35 // pred_check_branch
          %2064 = sbr.rel (%p2062) target = $region64
        $region63: #{tpu_custom_call.1} parent=35 // pred_region
          %v2065 = vld [vmem:[#allocation2] sm:$0xff]
          %v2066 = vld [vmem:[#allocation2 + $0x8] sm:$0xff]
          %v2067 = vld [vmem:[#allocation2 + $0x10] sm:$0xff]
          %v2068 = vld [vmem:[#allocation2 + $0x18] sm:$0xff]
          %v2069 = vld [vmem:[#allocation2 + $0x20] sm:$0xff]
          %v2070 = vld [vmem:[#allocation2 + $0x28] sm:$0xff]
          %v2071 = vld [vmem:[#allocation2 + $0x30] sm:$0xff]
          %v2072 = vld [vmem:[#allocation2 + $0x38] sm:$0xff]
          %v2073 = vld [vmem:[#allocation2 + $0x40] sm:$0xff]
          %v2074 = vld [vmem:[#allocation2 + $0x48] sm:$0xff]
          %v2075 = vld [vmem:[#allocation2 + $0x50] sm:$0xff]
          %v2076 = vld [vmem:[#allocation2 + $0x58] sm:$0xff]
          %v2077 = vld [vmem:[#allocation2 + $0x60] sm:$0xff]
          %v2078 = vld [vmem:[#allocation2 + $0x68] sm:$0xff]
          %v2079 = vld [vmem:[#allocation2 + $0x70] sm:$0xff]
          %v2080 = vld [vmem:[#allocation2 + $0x78] sm:$0xff]
          %v2081 = vld [vmem:[#allocation2 + $0x80] sm:$0xff]
          %v2082 = vld [vmem:[#allocation2 + $0x88] sm:$0xff]
          %v2083 = vld [vmem:[#allocation2 + $0x90] sm:$0xff]
          %v2084 = vld [vmem:[#allocation2 + $0x98] sm:$0xff]
          %v2085 = vld [vmem:[#allocation2 + $0xa0] sm:$0xff]
          %v2086 = vld [vmem:[#allocation2 + $0xa8] sm:$0xff]
          %v2087 = vld [vmem:[#allocation2 + $0xb0] sm:$0xff]
          %v2088 = vld [vmem:[#allocation2 + $0xb8] sm:$0xff]
          %v2089 = vld [vmem:[#allocation2 + $0xc0] sm:$0xff]
          %v2090 = vld [vmem:[#allocation2 + $0xc8] sm:$0xff]
          %v2091 = vld [vmem:[#allocation2 + $0xd0] sm:$0xff]
          %v2092 = vld [vmem:[#allocation2 + $0xd8] sm:$0xff]
          %v2093 = vld [vmem:[#allocation2 + $0xe0] sm:$0xff]
          %v2094 = vld [vmem:[#allocation2 + $0xe8] sm:$0xff]
          %v2095 = vld [vmem:[#allocation2 + $0xf0] sm:$0xff]
          %v2096 = vld [vmem:[#allocation2 + $0xf8] sm:$0xff]
          %v2097 = vld [vmem:[#allocation2 + $0x100] sm:$0xff]
          %v2098 = vld [vmem:[#allocation2 + $0x108] sm:$0xff]
          %v2099 = vld [vmem:[#allocation2 + $0x110] sm:$0xff]
          %v2100 = vld [vmem:[#allocation2 + $0x118] sm:$0xff]
          %v2101 = vld [vmem:[#allocation2 + $0x120] sm:$0xff]
          %v2102 = vld [vmem:[#allocation2 + $0x128] sm:$0xff]
          %v2103 = vld [vmem:[#allocation2 + $0x130] sm:$0xff]
          %v2104 = vld [vmem:[#allocation2 + $0x138] sm:$0xff]
          %v2105 = vld [vmem:[#allocation2 + $0x140] sm:$0xff]
          %v2106 = vld [vmem:[#allocation2 + $0x148] sm:$0xff]
          %v2107 = vld [vmem:[#allocation2 + $0x150] sm:$0xff]
          %v2108 = vld [vmem:[#allocation2 + $0x158] sm:$0xff]
          %v2109 = vld [vmem:[#allocation2 + $0x160] sm:$0xff]
          %v2110 = vld [vmem:[#allocation2 + $0x168] sm:$0xff]
          %v2111 = vld [vmem:[#allocation2 + $0x170] sm:$0xff]
          %v2112 = vld [vmem:[#allocation2 + $0x178] sm:$0xff]
          %v2113 = vld [vmem:[#allocation2 + $0x180] sm:$0xff]
          %v2114 = vld [vmem:[#allocation2 + $0x188] sm:$0xff]
          %v2115 = vld [vmem:[#allocation2 + $0x190] sm:$0xff]
          %v2116 = vld [vmem:[#allocation2 + $0x198] sm:$0xff]
          %v2117 = vld [vmem:[#allocation2 + $0x1a0] sm:$0xff]
          %v2118 = vld [vmem:[#allocation2 + $0x1a8] sm:$0xff]
          %v2119 = vld [vmem:[#allocation2 + $0x1b0] sm:$0xff]
          %v2120 = vld [vmem:[#allocation2 + $0x1b8] sm:$0xff]
          %v2121 = vld [vmem:[#allocation2 + $0x1c0] sm:$0xff]
          %v2122 = vld [vmem:[#allocation2 + $0x1c8] sm:$0xff]
          %v2123 = vld [vmem:[#allocation2 + $0x1d0] sm:$0xff]
          %v2124 = vld [vmem:[#allocation2 + $0x1d8] sm:$0xff]
          %v2125 = vld [vmem:[#allocation2 + $0x1e0] sm:$0xff]
          %v2126 = vld [vmem:[#allocation2 + $0x1e8] sm:$0xff]
          %v2127 = vld [vmem:[#allocation2 + $0x1f0] sm:$0xff]
          %v2128 = vld [vmem:[#allocation2 + $0x1f8] sm:$0xff]
          %v2129 = vld [vmem:[%s311] sm:$0xf]
          %v2131 = vlaneseq
          %v2132 = vshrl.u32 %v2131, 7
          %v2133 = vsub.s32 0, %v2132
          %v2134 = vrot.slane %v2129, %v2133
          %v2135 = vlaneseq
          %v2136 = vshrl.u32 %v2135, 7
          %v2137 = vsub.s32 1, %v2136
          %v2138 = vrot.slane %v2129, %v2137
          %v2139 = vlaneseq
          %v2140 = vshrl.u32 %v2139, 7
          %v2141 = vsub.s32 2, %v2140
          %v2142 = vrot.slane %v2129, %v2141
          %v2143 = vlaneseq
          %v2144 = vshrl.u32 %v2143, 7
          %v2145 = vsub.s32 3, %v2144
          %v2146 = vrot.slane %v2129, %v2145
          %v2151 = vadd.f32 %v2065, %v2134
          %v2152 = vadd.f32 %v2066, %v2138
          %v2153 = vadd.f32 %v2067, %v2142
          %v2154 = vadd.f32 %v2068, %v2146
          %v2155 = vadd.f32 %v2069, %v2134
          %v2156 = vadd.f32 %v2070, %v2138
          %v2157 = vadd.f32 %v2071, %v2142
          %v2158 = vadd.f32 %v2072, %v2146
          %v2159 = vadd.f32 %v2073, %v2134
          %v2160 = vadd.f32 %v2074, %v2138
          %v2161 = vadd.f32 %v2075, %v2142
          %v2162 = vadd.f32 %v2076, %v2146
          %v2163 = vadd.f32 %v2077, %v2134
          %v2164 = vadd.f32 %v2078, %v2138
          %v2165 = vadd.f32 %v2079, %v2142
          %v2166 = vadd.f32 %v2080, %v2146
          %v2167 = vadd.f32 %v2081, %v2134
          %v2168 = vadd.f32 %v2082, %v2138
          %v2169 = vadd.f32 %v2083, %v2142
          %v2170 = vadd.f32 %v2084, %v2146
          %v2171 = vadd.f32 %v2085, %v2134
          %v2172 = vadd.f32 %v2086, %v2138
          %v2173 = vadd.f32 %v2087, %v2142
          %v2174 = vadd.f32 %v2088, %v2146
          %v2175 = vadd.f32 %v2089, %v2134
          %v2176 = vadd.f32 %v2090, %v2138
          %v2177 = vadd.f32 %v2091, %v2142
          %v2178 = vadd.f32 %v2092, %v2146
          %v2179 = vadd.f32 %v2093, %v2134
          %v2180 = vadd.f32 %v2094, %v2138
          %v2181 = vadd.f32 %v2095, %v2142
          %v2182 = vadd.f32 %v2096, %v2146
          %v2183 = vadd.f32 %v2097, %v2134
          %v2184 = vadd.f32 %v2098, %v2138
          %v2185 = vadd.f32 %v2099, %v2142
          %v2186 = vadd.f32 %v2100, %v2146
          %v2187 = vadd.f32 %v2101, %v2134
          %v2188 = vadd.f32 %v2102, %v2138
          %v2189 = vadd.f32 %v2103, %v2142
          %v2190 = vadd.f32 %v2104, %v2146
          %v2191 = vadd.f32 %v2105, %v2134
          %v2192 = vadd.f32 %v2106, %v2138
          %v2193 = vadd.f32 %v2107, %v2142
          %v2194 = vadd.f32 %v2108, %v2146
          %v2195 = vadd.f32 %v2109, %v2134
          %v2196 = vadd.f32 %v2110, %v2138
          %v2197 = vadd.f32 %v2111, %v2142
          %v2198 = vadd.f32 %v2112, %v2146
          %v2199 = vadd.f32 %v2113, %v2134
          %v2200 = vadd.f32 %v2114, %v2138
          %v2201 = vadd.f32 %v2115, %v2142
          %v2202 = vadd.f32 %v2116, %v2146
          %v2203 = vadd.f32 %v2117, %v2134
          %v2204 = vadd.f32 %v2118, %v2138
          %v2205 = vadd.f32 %v2119, %v2142
          %v2206 = vadd.f32 %v2120, %v2146
          %v2207 = vadd.f32 %v2121, %v2134
          %v2208 = vadd.f32 %v2122, %v2138
          %v2209 = vadd.f32 %v2123, %v2142
          %v2210 = vadd.f32 %v2124, %v2146
          %v2211 = vadd.f32 %v2125, %v2134
          %v2212 = vadd.f32 %v2126, %v2138
          %v2213 = vadd.f32 %v2127, %v2142
          %v2214 = vadd.f32 %v2128, %v2146
          %v2215 = vmax.f32 %v2151, 0.0
          %v2216 = vmax.f32 %v2152, 0.0
          %v2217 = vmax.f32 %v2153, 0.0
          %v2218 = vmax.f32 %v2154, 0.0
          %v2219 = vmax.f32 %v2155, 0.0
          %v2220 = vmax.f32 %v2156, 0.0
          %v2221 = vmax.f32 %v2157, 0.0
          %v2222 = vmax.f32 %v2158, 0.0
          %v2223 = vmax.f32 %v2159, 0.0
          %v2224 = vmax.f32 %v2160, 0.0
          %v2225 = vmax.f32 %v2161, 0.0
          %v2226 = vmax.f32 %v2162, 0.0
          %v2227 = vmax.f32 %v2163, 0.0
          %v2228 = vmax.f32 %v2164, 0.0
          %v2229 = vmax.f32 %v2165, 0.0
          %v2230 = vmax.f32 %v2166, 0.0
          %v2231 = vmax.f32 %v2167, 0.0
          %v2232 = vmax.f32 %v2168, 0.0
          %v2233 = vmax.f32 %v2169, 0.0
          %v2234 = vmax.f32 %v2170, 0.0
          %v2235 = vmax.f32 %v2171, 0.0
          %v2236 = vmax.f32 %v2172, 0.0
          %v2237 = vmax.f32 %v2173, 0.0
          %v2238 = vmax.f32 %v2174, 0.0
          %v2239 = vmax.f32 %v2175, 0.0
          %v2240 = vmax.f32 %v2176, 0.0
          %v2241 = vmax.f32 %v2177, 0.0
          %v2242 = vmax.f32 %v2178, 0.0
          %v2243 = vmax.f32 %v2179, 0.0
          %v2244 = vmax.f32 %v2180, 0.0
          %v2245 = vmax.f32 %v2181, 0.0
          %v2246 = vmax.f32 %v2182, 0.0
          %v2247 = vmax.f32 %v2183, 0.0
          %v2248 = vmax.f32 %v2184, 0.0
          %v2249 = vmax.f32 %v2185, 0.0
          %v2250 = vmax.f32 %v2186, 0.0
          %v2251 = vmax.f32 %v2187, 0.0
          %v2252 = vmax.f32 %v2188, 0.0
          %v2253 = vmax.f32 %v2189, 0.0
          %v2254 = vmax.f32 %v2190, 0.0
          %v2255 = vmax.f32 %v2191, 0.0
          %v2256 = vmax.f32 %v2192, 0.0
          %v2257 = vmax.f32 %v2193, 0.0
          %v2258 = vmax.f32 %v2194, 0.0
          %v2259 = vmax.f32 %v2195, 0.0
          %v2260 = vmax.f32 %v2196, 0.0
          %v2261 = vmax.f32 %v2197, 0.0
          %v2262 = vmax.f32 %v2198, 0.0
          %v2263 = vmax.f32 %v2199, 0.0
          %v2264 = vmax.f32 %v2200, 0.0
          %v2265 = vmax.f32 %v2201, 0.0
          %v2266 = vmax.f32 %v2202, 0.0
          %v2267 = vmax.f32 %v2203, 0.0
          %v2268 = vmax.f32 %v2204, 0.0
          %v2269 = vmax.f32 %v2205, 0.0
          %v2270 = vmax.f32 %v2206, 0.0
          %v2271 = vmax.f32 %v2207, 0.0
          %v2272 = vmax.f32 %v2208, 0.0
          %v2273 = vmax.f32 %v2209, 0.0
          %v2274 = vmax.f32 %v2210, 0.0
          %v2275 = vmax.f32 %v2211, 0.0
          %v2276 = vmax.f32 %v2212, 0.0
          %v2277 = vmax.f32 %v2213, 0.0
          %v2278 = vmax.f32 %v2214, 0.0
          %v2279 = vld [vmem:[#allocation3] sm:$0xff]
          %v2280 = vld [vmem:[#allocation3 + $0x8] sm:$0xff]
          %v2281 = vld [vmem:[#allocation3 + $0x10] sm:$0xff]
          %v2282 = vld [vmem:[#allocation3 + $0x18] sm:$0xff]
          %v2283 = vld [vmem:[#allocation3 + $0x20] sm:$0xff]
          %v2284 = vld [vmem:[#allocation3 + $0x28] sm:$0xff]
          %v2285 = vld [vmem:[#allocation3 + $0x30] sm:$0xff]
          %v2286 = vld [vmem:[#allocation3 + $0x38] sm:$0xff]
          %v2287 = vld [vmem:[#allocation3 + $0x40] sm:$0xff]
          %v2288 = vld [vmem:[#allocation3 + $0x48] sm:$0xff]
          %v2289 = vld [vmem:[#allocation3 + $0x50] sm:$0xff]
          %v2290 = vld [vmem:[#allocation3 + $0x58] sm:$0xff]
          %v2291 = vld [vmem:[#allocation3 + $0x60] sm:$0xff]
          %v2292 = vld [vmem:[#allocation3 + $0x68] sm:$0xff]
          %v2293 = vld [vmem:[#allocation3 + $0x70] sm:$0xff]
          %v2294 = vld [vmem:[#allocation3 + $0x78] sm:$0xff]
          %v2295 = vpack.c.bf16 %v2219, %v2215
          %v2296 = vpack.c.bf16 %v2220, %v2216
          %v2297 = vpack.c.bf16 %v2221, %v2217
          %v2298 = vpack.c.bf16 %v2222, %v2218
          %v2299 = vpack.c.bf16 %v2227, %v2223
          %v2300 = vpack.c.bf16 %v2228, %v2224
          %v2301 = vpack.c.bf16 %v2229, %v2225
          %v2302 = vpack.c.bf16 %v2230, %v2226
          %v2303 = vpack.c.bf16 %v2235, %v2231
          %v2304 = vpack.c.bf16 %v2236, %v2232
          %v2305 = vpack.c.bf16 %v2237, %v2233
          %v2306 = vpack.c.bf16 %v2238, %v2234
          %v2307 = vpack.c.bf16 %v2243, %v2239
          %v2308 = vpack.c.bf16 %v2244, %v2240
          %v2309 = vpack.c.bf16 %v2245, %v2241
          %v2310 = vpack.c.bf16 %v2246, %v2242
          %v2311 = vpack.c.bf16 %v2251, %v2247
          %v2312 = vpack.c.bf16 %v2252, %v2248
          %v2313 = vpack.c.bf16 %v2253, %v2249
          %v2314 = vpack.c.bf16 %v2254, %v2250
          %v2315 = vpack.c.bf16 %v2259, %v2255
          %v2316 = vpack.c.bf16 %v2260, %v2256
          %v2317 = vpack.c.bf16 %v2261, %v2257
          %v2318 = vpack.c.bf16 %v2262, %v2258
          %v2319 = vpack.c.bf16 %v2267, %v2263
          %v2320 = vpack.c.bf16 %v2268, %v2264
          %v2321 = vpack.c.bf16 %v2269, %v2265
          %v2322 = vpack.c.bf16 %v2270, %v2266
          %v2323 = vpack.c.bf16 %v2275, %v2271
          %v2324 = vpack.c.bf16 %v2276, %v2272
          %v2325 = vpack.c.bf16 %v2277, %v2273
          %v2326 = vpack.c.bf16 %v2278, %v2274
          %v2327 = vld [vmem:[%s320] sm:$0xf]
          %v2328 = vld [vmem:[%s320 + $0x4] sm:$0xf]
          %v2329 = vld [vmem:[%s320 + $0x8] sm:$0xf]
          %v2330 = vld [vmem:[%s320 + $0xc] sm:$0xf]
          %v2331 = vld [vmem:[%s320 + $0x10] sm:$0xf]
          %v2332 = vld [vmem:[%s320 + $0x14] sm:$0xf]
          %v2333 = vld [vmem:[%s320 + $0x18] sm:$0xf]
          %v2334 = vld [vmem:[%s320 + $0x1c] sm:$0xf]
          %v2335 = vld [vmem:[%s320 + $0x20] sm:$0xf]
          %v2336 = vld [vmem:[%s320 + $0x24] sm:$0xf]
          %v2337 = vld [vmem:[%s320 + $0x28] sm:$0xf]
          %v2338 = vld [vmem:[%s320 + $0x2c] sm:$0xf]
          %v2339 = vld [vmem:[%s320 + $0x30] sm:$0xf]
          %v2340 = vld [vmem:[%s320 + $0x34] sm:$0xf]
          %v2341 = vld [vmem:[%s320 + $0x38] sm:$0xf]
          %v2342 = vld [vmem:[%s320 + $0x3c] sm:$0xf]
          %v2343 = vld [vmem:[%s320 + $0x40] sm:$0xf]
          %v2344 = vld [vmem:[%s320 + $0x44] sm:$0xf]
          %v2345 = vld [vmem:[%s320 + $0x48] sm:$0xf]
          %v2346 = vld [vmem:[%s320 + $0x4c] sm:$0xf]
          %v2347 = vld [vmem:[%s320 + $0x50] sm:$0xf]
          %v2348 = vld [vmem:[%s320 + $0x54] sm:$0xf]
          %v2349 = vld [vmem:[%s320 + $0x58] sm:$0xf]
          %v2350 = vld [vmem:[%s320 + $0x5c] sm:$0xf]
          %v2351 = vld [vmem:[%s320 + $0x60] sm:$0xf]
          %v2352 = vld [vmem:[%s320 + $0x64] sm:$0xf]
          %v2353 = vld [vmem:[%s320 + $0x68] sm:$0xf]
          %v2354 = vld [vmem:[%s320 + $0x6c] sm:$0xf]
          %v2355 = vld [vmem:[%s320 + $0x70] sm:$0xf]
          %v2356 = vld [vmem:[%s320 + $0x74] sm:$0xf]
          %v2357 = vld [vmem:[%s320 + $0x78] sm:$0xf]
          %v2358 = vld [vmem:[%s320 + $0x7c] sm:$0xf]
          %v2359 = vld [vmem:[%s320 + $0x80] sm:$0xf]
          %v2360 = vld [vmem:[%s320 + $0x84] sm:$0xf]
          %v2361 = vld [vmem:[%s320 + $0x88] sm:$0xf]
          %v2362 = vld [vmem:[%s320 + $0x8c] sm:$0xf]
          %v2363 = vld [vmem:[%s320 + $0x90] sm:$0xf]
          %v2364 = vld [vmem:[%s320 + $0x94] sm:$0xf]
          %v2365 = vld [vmem:[%s320 + $0x98] sm:$0xf]
          %v2366 = vld [vmem:[%s320 + $0x9c] sm:$0xf]
          %v2367 = vld [vmem:[%s320 + $0xa0] sm:$0xf]
          %v2368 = vld [vmem:[%s320 + $0xa4] sm:$0xf]
          %v2369 = vld [vmem:[%s320 + $0xa8] sm:$0xf]
          %v2370 = vld [vmem:[%s320 + $0xac] sm:$0xf]
          %v2371 = vld [vmem:[%s320 + $0xb0] sm:$0xf]
          %v2372 = vld [vmem:[%s320 + $0xb4] sm:$0xf]
          %v2373 = vld [vmem:[%s320 + $0xb8] sm:$0xf]
          %v2374 = vld [vmem:[%s320 + $0xbc] sm:$0xf]
          %v2375 = vld [vmem:[%s320 + $0xc0] sm:$0xf]
          %v2376 = vld [vmem:[%s320 + $0xc4] sm:$0xf]
          %v2377 = vld [vmem:[%s320 + $0xc8] sm:$0xf]
          %v2378 = vld [vmem:[%s320 + $0xcc] sm:$0xf]
          %v2379 = vld [vmem:[%s320 + $0xd0] sm:$0xf]
          %v2380 = vld [vmem:[%s320 + $0xd4] sm:$0xf]
          %v2381 = vld [vmem:[%s320 + $0xd8] sm:$0xf]
          %v2382 = vld [vmem:[%s320 + $0xdc] sm:$0xf]
          %v2383 = vld [vmem:[%s320 + $0xe0] sm:$0xf]
          %v2384 = vld [vmem:[%s320 + $0xe4] sm:$0xf]
          %v2385 = vld [vmem:[%s320 + $0xe8] sm:$0xf]
          %v2386 = vld [vmem:[%s320 + $0xec] sm:$0xf]
          %v2387 = vld [vmem:[%s320 + $0xf0] sm:$0xf]
          %v2388 = vld [vmem:[%s320 + $0xf4] sm:$0xf]
          %v2389 = vld [vmem:[%s320 + $0xf8] sm:$0xf]
          %v2390 = vld [vmem:[%s320 + $0xfc] sm:$0xf]
          %v2455 = vunpack.c.l.b16 %v2327
          %v2456 = vunpack.c.l.b16 %v2328
          %v2457 = vunpack.c.l.b16 %v2329
          %v2458 = vunpack.c.l.b16 %v2330
          %v2459 = vunpack.c.l.b16 %v2331
          %v2460 = vunpack.c.l.b16 %v2332
          %v2461 = vunpack.c.l.b16 %v2333
          %v2462 = vunpack.c.l.b16 %v2334
          %v2463 = vunpack.c.l.b16 %v2335
          %v2464 = vunpack.c.l.b16 %v2336
          %v2465 = vunpack.c.l.b16 %v2337
          %v2466 = vunpack.c.l.b16 %v2338
          %v2467 = vunpack.c.l.b16 %v2339
          %v2468 = vunpack.c.l.b16 %v2340
          %v2469 = vunpack.c.l.b16 %v2341
          %v2470 = vunpack.c.l.b16 %v2342
          %v2471 = vunpack.c.l.b16 %v2343
          %v2472 = vunpack.c.l.b16 %v2344
          %v2473 = vunpack.c.l.b16 %v2345
          %v2474 = vunpack.c.l.b16 %v2346
          %v2475 = vunpack.c.l.b16 %v2347
          %v2476 = vunpack.c.l.b16 %v2348
          %v2477 = vunpack.c.l.b16 %v2349
          %v2478 = vunpack.c.l.b16 %v2350
          %v2479 = vunpack.c.l.b16 %v2351
          %v2480 = vunpack.c.l.b16 %v2352
          %v2481 = vunpack.c.l.b16 %v2353
          %v2482 = vunpack.c.l.b16 %v2354
          %v2483 = vunpack.c.l.b16 %v2355
          %v2484 = vunpack.c.l.b16 %v2356
          %v2485 = vunpack.c.l.b16 %v2357
          %v2486 = vunpack.c.l.b16 %v2358
          %v2487 = vunpack.c.l.b16 %v2359
          %v2488 = vunpack.c.l.b16 %v2360
          %v2489 = vunpack.c.l.b16 %v2361
          %v2490 = vunpack.c.l.b16 %v2362
          %v2491 = vunpack.c.l.b16 %v2363
          %v2492 = vunpack.c.l.b16 %v2364
          %v2493 = vunpack.c.l.b16 %v2365
          %v2494 = vunpack.c.l.b16 %v2366
          %v2495 = vunpack.c.l.b16 %v2367
          %v2496 = vunpack.c.l.b16 %v2368
          %v2497 = vunpack.c.l.b16 %v2369
          %v2498 = vunpack.c.l.b16 %v2370
          %v2499 = vunpack.c.l.b16 %v2371
          %v2500 = vunpack.c.l.b16 %v2372
          %v2501 = vunpack.c.l.b16 %v2373
          %v2502 = vunpack.c.l.b16 %v2374
          %v2503 = vunpack.c.l.b16 %v2375
          %v2504 = vunpack.c.l.b16 %v2376
          %v2505 = vunpack.c.l.b16 %v2377
          %v2506 = vunpack.c.l.b16 %v2378
          %v2507 = vunpack.c.l.b16 %v2379
          %v2508 = vunpack.c.l.b16 %v2380
          %v2509 = vunpack.c.l.b16 %v2381
          %v2510 = vunpack.c.l.b16 %v2382
          %v2511 = vunpack.c.l.b16 %v2383
          %v2512 = vunpack.c.l.b16 %v2384
          %v2513 = vunpack.c.l.b16 %v2385
          %v2514 = vunpack.c.l.b16 %v2386
          %v2515 = vunpack.c.l.b16 %v2387
          %v2516 = vunpack.c.l.b16 %v2388
          %v2517 = vunpack.c.l.b16 %v2389
          %v2518 = vunpack.c.l.b16 %v2390
          %v2519 = vpack.c.b16 %v2456, %v2455
          %v2520 = vpack.c.b16 %v2458, %v2457
          %v2521 = vpack.c.b16 %v2460, %v2459
          %v2522 = vpack.c.b16 %v2462, %v2461
          %v2523 = vpack.c.b16 %v2464, %v2463
          %v2524 = vpack.c.b16 %v2466, %v2465
          %v2525 = vpack.c.b16 %v2468, %v2467
          %v2526 = vpack.c.b16 %v2470, %v2469
          %v2527 = vpack.c.b16 %v2472, %v2471
          %v2528 = vpack.c.b16 %v2474, %v2473
          %v2529 = vpack.c.b16 %v2476, %v2475
          %v2530 = vpack.c.b16 %v2478, %v2477
          %v2531 = vpack.c.b16 %v2480, %v2479
          %v2532 = vpack.c.b16 %v2482, %v2481
          %v2533 = vpack.c.b16 %v2484, %v2483
          %v2534 = vpack.c.b16 %v2486, %v2485
          %v2535 = vpack.c.b16 %v2488, %v2487
          %v2536 = vpack.c.b16 %v2490, %v2489
          %v2537 = vpack.c.b16 %v2492, %v2491
          %v2538 = vpack.c.b16 %v2494, %v2493
          %v2539 = vpack.c.b16 %v2496, %v2495
          %v2540 = vpack.c.b16 %v2498, %v2497
          %v2541 = vpack.c.b16 %v2500, %v2499
          %v2542 = vpack.c.b16 %v2502, %v2501
          %v2543 = vpack.c.b16 %v2504, %v2503
          %v2544 = vpack.c.b16 %v2506, %v2505
          %v2545 = vpack.c.b16 %v2508, %v2507
          %v2546 = vpack.c.b16 %v2510, %v2509
          %v2547 = vpack.c.b16 %v2512, %v2511
          %v2548 = vpack.c.b16 %v2514, %v2513
          %v2549 = vpack.c.b16 %v2516, %v2515
          %v2550 = vpack.c.b16 %v2518, %v2517
          %2583 = vmatprep.subr.bf16.mxu0 0
          %2584 = vmatpush1.bf16.msra.mxu0 %v2519
          %2585 = vmatprep.subr.bf16.mxu0 0
          %2586 = vmatpush1.bf16.msra.mxu0 %v2520
          %2587 = vmatprep.subr.bf16.mxu0 0
          %2588 = vmatpush1.bf16.msra.mxu0 %v2521
          %2589 = vmatprep.subr.bf16.mxu0 0
          %2590 = vmatpush1.bf16.msra.mxu0 %v2522
          %2591 = vmatprep.subr.bf16.mxu0 0
          %2592 = vmatpush1.bf16.msra.mxu0 %v2523
          %2593 = vmatprep.subr.bf16.mxu0 0
          %2594 = vmatpush1.bf16.msra.mxu0 %v2524
          %2595 = vmatprep.subr.bf16.mxu0 0
          %2596 = vmatpush1.bf16.msra.mxu0 %v2525
          %2597 = vmatprep.subr.bf16.mxu0 0
          %2598 = vmatpush1.bf16.msra.mxu0 %v2526
          %2599 = vmatprep.subr.bf16.mxu0 0
          %2600 = vmatpush1.bf16.msra.mxu0 %v2527
          %2601 = vmatprep.subr.bf16.mxu0 0
          %2602 = vmatpush1.bf16.msra.mxu0 %v2528
          %2603 = vmatprep.subr.bf16.mxu0 0
          %2604 = vmatpush1.bf16.msra.mxu0 %v2529
          %2605 = vmatprep.subr.bf16.mxu0 0
          %2606 = vmatpush1.bf16.msra.mxu0 %v2530
          %2607 = vmatprep.subr.bf16.mxu0 0
          %2608 = vmatpush1.bf16.msra.mxu0 %v2531
          %2609 = vmatprep.subr.bf16.mxu0 0
          %2610 = vmatpush1.bf16.msra.mxu0 %v2532
          %2611 = vmatprep.subr.bf16.mxu0 0
          %2612 = vmatpush1.bf16.msra.mxu0 %v2533
          %2613 = vmatprep.subr.bf16.mxu0 0
          %2614 = vmatpush1.bf16.msra.mxu0 %v2534
          %2615 = vmatprep.mubr.bf16.mxu0 %v2296
          %2616 = vmatmul.mubr.bf16.gmra.mrb[0].mxu0 %v2295
          %v2617 = vpop.f32.mrb[0].mxu0
          %v2618 = vadd.f32 0.0, %v2617
          %v2619 = vpop.f32.mrb[0].mxu0
          %v2620 = vpop.f32.mrb[0].mxu0
          %v2621 = vadd.f32 0.0, %v2620
          %v2622 = vpop.f32.mrb[0].mxu0
          %2623 = vmatprep.mubr.bf16.mxu0 %v2300
          %2624 = vmatmul.mubr.bf16.gmra.mrb[0].mxu0 %v2299
          %v2625 = vpop.f32.mrb[0].mxu0
          %v2626 = vadd.f32 0.0, %v2625
          %v2627 = vpop.f32.mrb[0].mxu0
          %v2628 = vpop.f32.mrb[0].mxu0
          %v2629 = vadd.f32 0.0, %v2628
          %v2630 = vpop.f32.mrb[0].mxu0
          %2631 = vmatprep.mubr.bf16.mxu0 %v2304
          %2632 = vmatmul.mubr.bf16.gmra.mrb[0].mxu0 %v2303
          %v2633 = vpop.f32.mrb[0].mxu0
          %v2634 = vadd.f32 0.0, %v2633
          %v2635 = vpop.f32.mrb[0].mxu0
          %v2636 = vpop.f32.mrb[0].mxu0
          %v2637 = vadd.f32 0.0, %v2636
          %v2638 = vpop.f32.mrb[0].mxu0
          %2639 = vmatprep.mubr.bf16.mxu0 %v2308
          %2640 = vmatmul.mubr.bf16.gmra.mrb[0].mxu0 %v2307
          %v2641 = vpop.f32.mrb[0].mxu0
          %v2642 = vadd.f32 0.0, %v2641
          %v2643 = vpop.f32.mrb[0].mxu0
          %v2644 = vpop.f32.mrb[0].mxu0
          %v2645 = vadd.f32 0.0, %v2644
          %v2646 = vpop.f32.mrb[0].mxu0
          %2647 = vmatprep.mubr.bf16.mxu0 %v2312
          %2648 = vmatmul.mubr.bf16.gmra.mrb[0].mxu0 %v2311
          %v2649 = vpop.f32.mrb[0].mxu0
          %v2650 = vadd.f32 0.0, %v2649
          %v2651 = vpop.f32.mrb[0].mxu0
          %v2652 = vpop.f32.mrb[0].mxu0
          %v2653 = vadd.f32 0.0, %v2652
          %v2654 = vpop.f32.mrb[0].mxu0
          %2655 = vmatprep.mubr.bf16.mxu0 %v2316
          %2656 = vmatmul.mubr.bf16.gmra.mrb[0].mxu0 %v2315
          %v2657 = vpop.f32.mrb[0].mxu0
          %v2658 = vadd.f32 0.0, %v2657
          %v2659 = vpop.f32.mrb[0].mxu0
          %v2660 = vpop.f32.mrb[0].mxu0
          %v2661 = vadd.f32 0.0, %v2660
          %v2662 = vpop.f32.mrb[0].mxu0
          %2663 = vmatprep.mubr.bf16.mxu0 %v2320
          %2664 = vmatmul.mubr.bf16.gmra.mrb[0].mxu0 %v2319
          %v2665 = vpop.f32.mrb[0].mxu0
          %v2666 = vadd.f32 0.0, %v2665
          %v2667 = vpop.f32.mrb[0].mxu0
          %v2668 = vpop.f32.mrb[0].mxu0
          %v2669 = vadd.f32 0.0, %v2668
          %v2670 = vpop.f32.mrb[0].mxu0
          %2671 = vmatprep.mubr.bf16.mxu0 %v2324
          %2672 = vmatmul.mubr.bf16.gmra.mrb[0].mxu0 %v2323
          %v2673 = vpop.f32.mrb[0].mxu0
          %v2674 = vadd.f32 0.0, %v2673
          %v2675 = vpop.f32.mrb[0].mxu0
          %v2676 = vpop.f32.mrb[0].mxu0
          %v2677 = vadd.f32 0.0, %v2676
          %v2678 = vpop.f32.mrb[0].mxu0
          %2679 = vdwg.mxu0
          %2680 = vmatprep.subr.bf16.mxu0 0
          %2681 = vmatpush1.bf16.msra.mxu0 %v2535
          %2682 = vmatprep.subr.bf16.mxu0 0
          %2683 = vmatpush1.bf16.msra.mxu0 %v2536
          %2684 = vmatprep.subr.bf16.mxu0 0
          %2685 = vmatpush1.bf16.msra.mxu0 %v2537
          %2686 = vmatprep.subr.bf16.mxu0 0
          %2687 = vmatpush1.bf16.msra.mxu0 %v2538
          %2688 = vmatprep.subr.bf16.mxu0 0
          %2689 = vmatpush1.bf16.msra.mxu0 %v2539
          %2690 = vmatprep.subr.bf16.mxu0 0
          %2691 = vmatpush1.bf16.msra.mxu0 %v2540
          %2692 = vmatprep.subr.bf16.mxu0 0
          %2693 = vmatpush1.bf16.msra.mxu0 %v2541
          %2694 = vmatprep.subr.bf16.mxu0 0
          %2695 = vmatpush1.bf16.msra.mxu0 %v2542
          %2696 = vmatprep.subr.bf16.mxu0 0
          %2697 = vmatpush1.bf16.msra.mxu0 %v2543
          %2698 = vmatprep.subr.bf16.mxu0 0
          %2699 = vmatpush1.bf16.msra.mxu0 %v2544
          %2700 = vmatprep.subr.bf16.mxu0 0
          %2701 = vmatpush1.bf16.msra.mxu0 %v2545
          %2702 = vmatprep.subr.bf16.mxu0 0
          %2703 = vmatpush1.bf16.msra.mxu0 %v2546
          %2704 = vmatprep.subr.bf16.mxu0 0
          %2705 = vmatpush1.bf16.msra.mxu0 %v2547
          %2706 = vmatprep.subr.bf16.mxu0 0
          %2707 = vmatpush1.bf16.msra.mxu0 %v2548
          %2708 = vmatprep.subr.bf16.mxu0 0
          %2709 = vmatpush1.bf16.msra.mxu0 %v2549
          %2710 = vmatprep.subr.bf16.mxu0 0
          %2711 = vmatpush1.bf16.msra.mxu0 %v2550
          %2712 = vmatprep.mubr.bf16.mxu0 %v2298
          %2713 = vmatmul.mubr.bf16.gmra.mrb[0].mxu0 %v2297
          %v2714 = vpop.f32.mrb[0].mxu0
          %v2715 = vadd.f32 %v2618, %v2714
          %v2716 = vpop.f32.mrb[0].mxu0
          %v2717 = vpop.f32.mrb[0].mxu0
          %v2718 = vadd.f32 %v2621, %v2717
          %v2719 = vpop.f32.mrb[0].mxu0
          %2720 = vmatprep.mubr.bf16.mxu0 %v2302
          %2721 = vmatmul.mubr.bf16.gmra.mrb[0].mxu0 %v2301
          %v2722 = vpop.f32.mrb[0].mxu0
          %v2723 = vadd.f32 %v2626, %v2722
          %v2724 = vpop.f32.mrb[0].mxu0
          %v2725 = vpop.f32.mrb[0].mxu0
          %v2726 = vadd.f32 %v2629, %v2725
          %v2727 = vpop.f32.mrb[0].mxu0
          %2728 = vmatprep.mubr.bf16.mxu0 %v2306
          %2729 = vmatmul.mubr.bf16.gmra.mrb[0].mxu0 %v2305
          %v2730 = vpop.f32.mrb[0].mxu0
          %v2731 = vadd.f32 %v2634, %v2730
          %v2732 = vpop.f32.mrb[0].mxu0
          %v2733 = vpop.f32.mrb[0].mxu0
          %v2734 = vadd.f32 %v2637, %v2733
          %v2735 = vpop.f32.mrb[0].mxu0
          %2736 = vmatprep.mubr.bf16.mxu0 %v2310
          %2737 = vmatmul.mubr.bf16.gmra.mrb[0].mxu0 %v2309
          %v2738 = vpop.f32.mrb[0].mxu0
          %v2739 = vadd.f32 %v2642, %v2738
          %v2740 = vpop.f32.mrb[0].mxu0
          %v2741 = vpop.f32.mrb[0].mxu0
          %v2742 = vadd.f32 %v2645, %v2741
          %v2743 = vpop.f32.mrb[0].mxu0
          %2744 = vmatprep.mubr.bf16.mxu0 %v2314
          %2745 = vmatmul.mubr.bf16.gmra.mrb[0].mxu0 %v2313
          %v2746 = vpop.f32.mrb[0].mxu0
          %v2747 = vadd.f32 %v2650, %v2746
          %v2748 = vpop.f32.mrb[0].mxu0
          %v2749 = vpop.f32.mrb[0].mxu0
          %v2750 = vadd.f32 %v2653, %v2749
          %v2751 = vpop.f32.mrb[0].mxu0
          %2752 = vmatprep.mubr.bf16.mxu0 %v2318
          %2753 = vmatmul.mubr.bf16.gmra.mrb[0].mxu0 %v2317
          %v2754 = vpop.f32.mrb[0].mxu0
          %v2755 = vadd.f32 %v2658, %v2754
          %v2756 = vpop.f32.mrb[0].mxu0
          %v2757 = vpop.f32.mrb[0].mxu0
          %v2758 = vadd.f32 %v2661, %v2757
          %v2759 = vpop.f32.mrb[0].mxu0
          %2760 = vmatprep.mubr.bf16.mxu0 %v2322
          %2761 = vmatmul.mubr.bf16.gmra.mrb[0].mxu0 %v2321
          %v2762 = vpop.f32.mrb[0].mxu0
          %v2763 = vadd.f32 %v2666, %v2762
          %v2764 = vpop.f32.mrb[0].mxu0
          %v2765 = vpop.f32.mrb[0].mxu0
          %v2766 = vadd.f32 %v2669, %v2765
          %v2767 = vpop.f32.mrb[0].mxu0
          %2768 = vmatprep.mubr.bf16.mxu0 %v2326
          %2769 = vmatmul.mubr.bf16.gmra.mrb[0].mxu0 %v2325
          %v2770 = vpop.f32.mrb[0].mxu0
          %v2771 = vadd.f32 %v2674, %v2770
          %v2772 = vpop.f32.mrb[0].mxu0
          %v2773 = vpop.f32.mrb[0].mxu0
          %v2774 = vadd.f32 %v2677, %v2773
          %v2775 = vpop.f32.mrb[0].mxu0
          %2776 = vdwg.mxu0
          %v2777 = vadd.f32 %v2279, %v2715
          %v2778 = vadd.f32 %v2280, %v2718
          %v2779 = vadd.f32 %v2281, %v2723
          %v2780 = vadd.f32 %v2282, %v2726
          %v2781 = vadd.f32 %v2283, %v2731
          %v2782 = vadd.f32 %v2284, %v2734
          %v2783 = vadd.f32 %v2285, %v2739
          %v2784 = vadd.f32 %v2286, %v2742
          %v2785 = vadd.f32 %v2287, %v2747
          %v2786 = vadd.f32 %v2288, %v2750
          %v2787 = vadd.f32 %v2289, %v2755
          %v2788 = vadd.f32 %v2290, %v2758
          %v2789 = vadd.f32 %v2291, %v2763
          %v2790 = vadd.f32 %v2292, %v2766
          %v2791 = vadd.f32 %v2293, %v2771
          %v2792 = vadd.f32 %v2294, %v2774
          %2793 = vst [vmem:[#allocation3] sm:$0xff] %v2777
          %2794 = vst [vmem:[#allocation3 + $0x8] sm:$0xff] %v2778
          %2795 = vst [vmem:[#allocation3 + $0x10] sm:$0xff] %v2779
          %2796 = vst [vmem:[#allocation3 + $0x18] sm:$0xff] %v2780
          %2797 = vst [vmem:[#allocation3 + $0x20] sm:$0xff] %v2781
          %2798 = vst [vmem:[#allocation3 + $0x28] sm:$0xff] %v2782
          %2799 = vst [vmem:[#allocation3 + $0x30] sm:$0xff] %v2783
          %2800 = vst [vmem:[#allocation3 + $0x38] sm:$0xff] %v2784
          %2801 = vst [vmem:[#allocation3 + $0x40] sm:$0xff] %v2785
          %2802 = vst [vmem:[#allocation3 + $0x48] sm:$0xff] %v2786
          %2803 = vst [vmem:[#allocation3 + $0x50] sm:$0xff] %v2787
          %2804 = vst [vmem:[#allocation3 + $0x58] sm:$0xff] %v2788
          %2805 = vst [vmem:[#allocation3 + $0x60] sm:$0xff] %v2789
          %2806 = vst [vmem:[#allocation3 + $0x68] sm:$0xff] %v2790
          %2807 = vst [vmem:[#allocation3 + $0x70] sm:$0xff] %v2791
          %2808 = vst [vmem:[#allocation3 + $0x78] sm:$0xff] %v2792
        $region64: #{tpu_custom_call.1} parent=35 // pred_fallthru
          _
        %p2809 = scmp.eq.s32.totalorder %s33, 1
        %p2810 = pnand %p2809, %p2061
        %p2811 = pneg %p2810
        // Predicated region
        $region65: #{tpu_custom_call.1} parent=35 // pred_check
          _
        $region66: #{tpu_custom_call.1} parent=35 // pred_check_branch
          %2813 = sbr.rel (%p2810) target = $region68
        $region67: #{tpu_custom_call.1} parent=35 // pred_region
          %v2814 = vld [vmem:[#allocation3] sm:$0xff]
          %v2815 = vld [vmem:[#allocation3 + $0x8] sm:$0xff]
          %v2816 = vld [vmem:[#allocation3 + $0x10] sm:$0xff]
          %v2817 = vld [vmem:[#allocation3 + $0x18] sm:$0xff]
          %v2818 = vld [vmem:[#allocation3 + $0x20] sm:$0xff]
          %v2819 = vld [vmem:[#allocation3 + $0x28] sm:$0xff]
          %v2820 = vld [vmem:[#allocation3 + $0x30] sm:$0xff]
          %v2821 = vld [vmem:[#allocation3 + $0x38] sm:$0xff]
          %v2822 = vld [vmem:[#allocation3 + $0x40] sm:$0xff]
          %v2823 = vld [vmem:[#allocation3 + $0x48] sm:$0xff]
          %v2824 = vld [vmem:[#allocation3 + $0x50] sm:$0xff]
          %v2825 = vld [vmem:[#allocation3 + $0x58] sm:$0xff]
          %v2826 = vld [vmem:[#allocation3 + $0x60] sm:$0xff]
          %v2827 = vld [vmem:[#allocation3 + $0x68] sm:$0xff]
          %v2828 = vld [vmem:[#allocation3 + $0x70] sm:$0xff]
          %v2829 = vld [vmem:[#allocation3 + $0x78] sm:$0xff]
          %v2830 = vxor.u32 %v2814, 2147483648
          %v2831 = vxor.u32 %v2815, 2147483648
          %v2832 = vxor.u32 %v2816, 2147483648
          %v2833 = vxor.u32 %v2817, 2147483648
          %v2834 = vxor.u32 %v2818, 2147483648
          %v2835 = vxor.u32 %v2819, 2147483648
          %v2836 = vxor.u32 %v2820, 2147483648
          %v2837 = vxor.u32 %v2821, 2147483648
          %v2838 = vxor.u32 %v2822, 2147483648
          %v2839 = vxor.u32 %v2823, 2147483648
          %v2840 = vxor.u32 %v2824, 2147483648
          %v2841 = vxor.u32 %v2825, 2147483648
          %v2842 = vxor.u32 %v2826, 2147483648
          %v2843 = vxor.u32 %v2827, 2147483648
          %v2844 = vxor.u32 %v2828, 2147483648
          %v2845 = vxor.u32 %v2829, 2147483648
          %v2846 = vmul.f32 %v2830, 1.442695
          %v2847 = vpow.pop %v2846
          %v2848 = vmul.f32 %v2831, 1.442695
          %v2849 = vpow.pop %v2848
          %v2850 = vmul.f32 %v2832, 1.442695
          %v2851 = vpow.pop %v2850
          %v2852 = vmul.f32 %v2833, 1.442695
          %v2853 = vpow.pop %v2852
          %v2854 = vmul.f32 %v2834, 1.442695
          %v2855 = vpow.pop %v2854
          %v2856 = vmul.f32 %v2835, 1.442695
          %v2857 = vpow.pop %v2856
          %v2858 = vmul.f32 %v2836, 1.442695
          %v2859 = vpow.pop %v2858
          %v2860 = vmul.f32 %v2837, 1.442695
          %v2861 = vpow.pop %v2860
          %v2862 = vmul.f32 %v2838, 1.442695
          %v2863 = vpow.pop %v2862
          %v2864 = vmul.f32 %v2839, 1.442695
          %v2865 = vpow.pop %v2864
          %v2866 = vmul.f32 %v2840, 1.442695
          %v2867 = vpow.pop %v2866
          %v2868 = vmul.f32 %v2841, 1.442695
          %v2869 = vpow.pop %v2868
          %v2870 = vmul.f32 %v2842, 1.442695
          %v2871 = vpow.pop %v2870
          %v2872 = vmul.f32 %v2843, 1.442695
          %v2873 = vpow.pop %v2872
          %v2874 = vmul.f32 %v2844, 1.442695
          %v2875 = vpow.pop %v2874
          %v2876 = vmul.f32 %v2845, 1.442695
          %v2877 = vpow.pop %v2876
          %v2878 = vadd.f32 %v2847, 1.0
          %v2879 = vadd.f32 %v2849, 1.0
          %v2880 = vadd.f32 %v2851, 1.0
          %v2881 = vadd.f32 %v2853, 1.0
          %v2882 = vadd.f32 %v2855, 1.0
          %v2883 = vadd.f32 %v2857, 1.0
          %v2884 = vadd.f32 %v2859, 1.0
          %v2885 = vadd.f32 %v2861, 1.0
          %v2886 = vadd.f32 %v2863, 1.0
          %v2887 = vadd.f32 %v2865, 1.0
          %v2888 = vadd.f32 %v2867, 1.0
          %v2889 = vadd.f32 %v2869, 1.0
          %v2890 = vadd.f32 %v2871, 1.0
          %v2891 = vadd.f32 %v2873, 1.0
          %v2892 = vadd.f32 %v2875, 1.0
          %v2893 = vadd.f32 %v2877, 1.0
          %v2894 = vrcp.pop %v2878
          %v2895 = vmul.f32 1.0, %v2894
          %v2896 = vrcp.pop %v2879
          %v2897 = vmul.f32 1.0, %v2896
          %v2898 = vrcp.pop %v2880
          %v2899 = vmul.f32 1.0, %v2898
          %v2900 = vrcp.pop %v2881
          %v2901 = vmul.f32 1.0, %v2900
          %v2902 = vrcp.pop %v2882
          %v2903 = vmul.f32 1.0, %v2902
          %v2904 = vrcp.pop %v2883
          %v2905 = vmul.f32 1.0, %v2904
          %v2906 = vrcp.pop %v2884
          %v2907 = vmul.f32 1.0, %v2906
          %v2908 = vrcp.pop %v2885
          %v2909 = vmul.f32 1.0, %v2908
          %v2910 = vrcp.pop %v2886
          %v2911 = vmul.f32 1.0, %v2910
          %v2912 = vrcp.pop %v2887
          %v2913 = vmul.f32 1.0, %v2912
          %v2914 = vrcp.pop %v2888
          %v2915 = vmul.f32 1.0, %v2914
          %v2916 = vrcp.pop %v2889
          %v2917 = vmul.f32 1.0, %v2916
          %v2918 = vrcp.pop %v2890
          %v2919 = vmul.f32 1.0, %v2918
          %v2920 = vrcp.pop %v2891
          %v2921 = vmul.f32 1.0, %v2920
          %v2922 = vrcp.pop %v2892
          %v2923 = vmul.f32 1.0, %v2922
          %v2924 = vrcp.pop %v2893
          %v2925 = vmul.f32 1.0, %v2924
          %2926 = vst [vmem:[%s359] sm:$0xff] %v2895
          %2927 = vst [vmem:[%s359 + $0x8] sm:$0xff] %v2897
          %2928 = vst [vmem:[%s359 + $0x10] sm:$0xff] %v2899
          %2929 = vst [vmem:[%s359 + $0x18] sm:$0xff] %v2901
          %2930 = vst [vmem:[%s359 + $0x20] sm:$0xff] %v2903
          %2931 = vst [vmem:[%s359 + $0x28] sm:$0xff] %v2905
          %2932 = vst [vmem:[%s359 + $0x30] sm:$0xff] %v2907
          %2933 = vst [vmem:[%s359 + $0x38] sm:$0xff] %v2909
          %2934 = vst [vmem:[%s359 + $0x40] sm:$0xff] %v2911
          %2935 = vst [vmem:[%s359 + $0x48] sm:$0xff] %v2913
          %2936 = vst [vmem:[%s359 + $0x50] sm:$0xff] %v2915
          %2937 = vst [vmem:[%s359 + $0x58] sm:$0xff] %v2917
          %2938 = vst [vmem:[%s359 + $0x60] sm:$0xff] %v2919
          %2939 = vst [vmem:[%s359 + $0x68] sm:$0xff] %v2921
          %2940 = vst [vmem:[%s359 + $0x70] sm:$0xff] %v2923
          %2941 = vst [vmem:[%s359 + $0x78] sm:$0xff] %v2925
        $region68: #{tpu_custom_call.1} parent=35 // pred_fallthru
          _
        %s2942 = sand.u32 %s162, 1
        %s2943 = scalar_lea.sflag [#allocation6], %s2942
        %s2944 = sand.u32 %s162, 1
        %s2945 = smul.addr %s2944, 128
        %s2946 = scalar_lea.vmem [#allocation12], %s2945
        // Predicated region
        $region69: #{tpu_custom_call.1} parent=35 // pred_check
          %p2947 = pneg %p172
        $region70: #{tpu_custom_call.1} parent=35 // pred_check_branch
          %2949 = sbr.rel (%p2947) target = $region72
        $region71: #{tpu_custom_call.1} parent=35 // pred_region
          %s2950 = smul.u32 16, %s32
          %s2952 = ssub.s32 2048, 2048
          %2953 = vsyncadd %s2943, %s2952
          %s2954 = smul.addr %s2950, 128
          %s2955 = scalar_lea.hbm %s4, %s2954
          %s2956 = sshll.u32 %s2946, 4
          %s2957 = int_to_ptr.vmem [resolvable:$true] %s2956
          %2962 = dma.vmem_to_hbm [thread:$0]  %s2957, 2048, %s2955, %s2943, 128, 128, 8
        $region72: #{tpu_custom_call.1} parent=35 // pred_fallthru
          _
      $region36: #{tpu_custom_call.1} parent=5 // pred_fallthru
        _
      %p2963 = scmp.le.s32.totalorder 2, %s22
      // Predicated region
      $region73: #{tpu_custom_call.1} parent=5 // pred_check
        %p2964 = pneg %p2963
      $region74: #{tpu_custom_call.1} parent=5 // pred_check_branch
        %2966 = sbr.rel (%p2964) target = $region76
      $region75: #{tpu_custom_call.1} parent=5 // pred_region
        %s2967 = ssub.s32 %s22, 2
        // Predicated region
        $region77: #{tpu_custom_call.1} parent=75 // pred_check
          %p2968 = pneg %p178
        $region78: #{tpu_custom_call.1} parent=75 // pred_check_branch
          %2970 = sbr.rel (%p2968) target = $region80
        $region79: #{tpu_custom_call.1} parent=75 // pred_region
          %s2971 = sand.u32 %s163, 1
          %s2972 = scalar_lea.sflag [#allocation6], %s2971
          %s2973 = sand.u32 %s163, 1
          %s2974 = smul.addr %s2973, 128
          %s2975 = scalar_lea.vmem [#allocation12], %s2974
          %2976 = dma.done %s2972, 2048
        $region80: #{tpu_custom_call.1} parent=75 // pred_fallthru
          _
      $region76: #{tpu_custom_call.1} parent=5 // pred_fallthru
        _
    $region6: #{tpu_custom_call.1} parent=1 // loop_footer
      %s26 = sadd.s32 1, %s22
    $region7: #{tpu_custom_call.1} parent=1 // loop_footer_branch
      %21 = sbr.rel target = $region3
    $region8: #{tpu_custom_call.1} parent=1 // loop_exit
      _
    %2977 = vsyncpa [#allocation5], 1
    %s2978 = scalar_lea.sflag [#allocation5], 1
    %2979 = vsyncpa %s2978, 1
    %2980 = vsyncpa [#allocation8], 1
    %s2981 = scalar_lea.sflag [#allocation8], 1
    %2982 = vsyncpa %s2981, 1
    %2983 = vsyncpa [#allocation11], 1
    %s2984 = scalar_lea.sflag [#allocation11], 1
    %2985 = vsyncpa %s2984, 1
    %2986 = vsyncpa [#allocation6], 1
    %s2987 = scalar_lea.sflag [#allocation6], 1
    %2988 = vsyncpa %s2987, 1

</llo_original>
